<compile_context>
chip_gen: v7x
topology: tpu7x:2x2x1
jax: 0.10.0
libtpu: 0.0.40
codegen_flags: <defaults>
</compile_context>

<pallas_src>
import functools

import jax
import jax.numpy as jnp
from jax.experimental import pallas as pl
from jax.experimental.pallas import tpu as pltpu

NEG_SLOPE = 0.01   # nn.LeakyReLU default
LANE = 128
NEG_BIG = -1e30    # pad bias for the final layer -> exp underflows to 0


def _round_up(x, m):
    return (x + m - 1) // m * m


def _leaky_relu(v):
    # max(v, 0.01*v) == LeakyReLU(v) for slopes in (0,1); mul+max on the VPU.
    return jnp.maximum(v, NEG_SLOPE * v)


def _bf16_valu_ok():
    """bf16 VALU exists on v6e/v7x; v5e/v5p and earlier would unpack/repack."""
    try:
        kind = jax.devices()[0].device_kind.lower()
    except Exception:
        return False
    return not any(t in kind for t in ("v2", "v3", "v4", "v5"))


def classifier_kernel(x_ref,
                      w0_ref, b0_ref,
                      w1_ref, b1_ref,
                      w2_ref, b2_ref,
                      w3_ref, b3_ref,
                      w4_ref, b4_ref,
                      w5_ref, b5_ref,
                      o_ref,
                      *, epi_dtype):
    """One batch tile of the fused MLP forward (weights resident in VMEM)."""

    def layer(h, w_ref, b_ref):
        # bf16 operands -> native MXU path; f32 accumulation on the MXU.
        acc = jnp.dot(h, w_ref[...], preferred_element_type=jnp.float32)
        # Hidden-layer epilogue in bf16 on v6e/v7x, f32 on v5e (no bf16 VALU).
        acc = acc.astype(epi_dtype) + b_ref[...]
        # Carry the activation between layers as bf16 (next matmul wants bf16).
        return _leaky_relu(acc).astype(jnp.bfloat16)

    h = x_ref[...].astype(jnp.bfloat16)
    h = layer(h, w0_ref, b0_ref)
    h = layer(h, w1_ref, b1_ref)
    h = layer(h, w2_ref, b2_ref)
    h = layer(h, w3_ref, b3_ref)
    h = layer(h, w4_ref, b4_ref)

    # TODO(synk): nn.Dropout is identity in eval/inference mode; training-mode
    # dropout (pltpu.prng_seed + pltpu.stateful_bernoulli) intentionally omitted.

    # Final layer + softmax stay fully f32 (pad-bias -1e30 => exp() == 0).
    logits = jnp.dot(h, w5_ref[...], preferred_element_type=jnp.float32) + b5_ref[...]
    m = jnp.max(logits, axis=1, keepdims=True)
    e = jnp.exp(logits - m)
    inv = pl.reciprocal(jnp.sum(e, axis=1, keepdims=True), approx=True)
    o_ref[...] = (e * inv).astype(o_ref.dtype)


def classifier_forward(x, params, *, batch_tile=1024, hidden_bf16=None):
    """x: [B, 10] f32; params: list of (W[in,out] f32, b[1,out] f32) pairs."""
    B, F = x.shape
    out_dim = params[-1][0].shape[1]
    n_layers = len(params)

    if hidden_bf16 is None:
        hidden_bf16 = _bf16_valu_ok()
    epi_dtype = jnp.bfloat16 if hidden_bf16 else jnp.float32

    # ---- pad tail layer dims (32/8/4 -> 128) for lane-dense layout ----------
    dims = [params[0][0].shape[0]] + [w.shape[1] for w, _ in params]
    pdims = [dims[0]] + [_round_up(d, LANE) for d in dims[1:]]

    padded = []
    for li, (w, b) in enumerate(params):
        pin, pout = pdims[li], pdims[li + 1]
        wp = jnp.zeros((pin, pout), jnp.float32).at[:w.shape[0], :w.shape[1]].set(w)
        last = li == n_layers - 1
        bias_fill = NEG_BIG if last else 0.0
        b_dtype = jnp.float32 if last else epi_dtype      # final bias stays f32
        bp = jnp.full((1, pout), bias_fill, jnp.float32).at[:, :b.shape[1]].set(b)
        padded.append((wp.astype(jnp.bfloat16), bp.astype(b_dtype)))

    # ---- batch tiling --------------------------------------------------------
    # TB=1024 default: amortizes the ~0.35 us per-step pipeline overhead on
    # v6e/v7x while staying in the sweet spot for v5e (single vst slot).
    TB = min(batch_tile, _round_up(B, 8))
    B_pad = _round_up(B, TB)
    n_tiles = B_pad // TB
    # v7x megacore: if a large batch landed in a single grid step, split it in
    # two so dimension_semantics=("parallel",) can shard across both cores.
    if n_tiles == 1 and TB >= 1024:
        TB = _round_up(TB // 2, 8)
        B_pad = _round_up(B, TB)
        n_tiles = B_pad // TB
    if B_pad != B:
        x = jnp.pad(x, ((0, B_pad - B), (0, 0)))
    out_pad = pdims[-1]

    flat = [x]
    in_specs = [pl.BlockSpec((TB, F), lambda i: (i, 0))]
    for w, b in padded:
        flat.extend([w, b])
        # Constant block index -> DMA'd once, stays VMEM-resident across steps.
        in_specs.append(pl.BlockSpec(w.shape, lambda i: (0, 0)))
        in_specs.append(pl.BlockSpec(b.shape, lambda i: (0, 0)))
    out_specs = pl.BlockSpec((TB, out_pad), lambda i: (i, 0))

    flops = 2 * B_pad * sum(w.shape[0] * w.shape[1] for w, _ in padded)
    bytes_accessed = (x.size * 4
                      + sum(w.size * 2 + b.size * b.dtype.itemsize
                            for w, b in padded)
                      + B_pad * out_pad * 2)              # bf16 output
    cost = pl.CostEstimate(flops=flops, bytes_accessed=bytes_accessed,
                           transcendentals=B_pad * out_pad)

    out = pl.pallas_call(
        functools.partial(classifier_kernel, epi_dtype=epi_dtype),
        out_shape=jax.ShapeDtypeStruct((B_pad, out_pad), jnp.bfloat16),
        grid=(n_tiles,),
        in_specs=in_specs,
        out_specs=out_specs,
        compiler_params=pltpu.CompilerParams(
            dimension_semantics=("parallel",),
            # Explicit scoped-VMEM budget: large TB fits with headroom even on
            # v7x (64 MiB physical); default scoped limit (16-32 MiB) is tight.
            vmem_limit_bytes=48 * 1024 * 1024),
        cost_estimate=cost,
    )(*flat)
    return out[:B, :out_dim].astype(jnp.float32)


def init_params(key):
    """Deterministic init matching the torch module's layer shapes.

    Returns weights already transposed to [in, out] and biases as [1, out].
    """
    dims = [10, 1024, 512, 128, 32, 8, 4]
    params = []
    for i in range(len(dims) - 1):
        fan_in, fan_out = dims[i], dims[i + 1]
        key, kw, kb = jax.random.split(key, 3)
        bound = 1.0 / jnp.sqrt(fan_in)  # torch.nn.Linear default uniform bound
        w = jax.random.uniform(kw, (fan_in, fan_out), jnp.float32, -bound, bound)
        b = jax.random.uniform(kb, (1, fan_out), jnp.float32, -bound, bound)
        params.append((w, b))
    return params


def reference_forward(x, params, *, hidden_bf16=None):
    """Plain-JAX reference mirroring the kernel's bf16 quantization choices."""
    if hidden_bf16 is None:
        hidden_bf16 = _bf16_valu_ok()
    epi_dtype = jnp.bfloat16 if hidden_bf16 else jnp.float32
    h = x.astype(jnp.bfloat16)
    for w, b in params[:-1]:
        acc = jnp.dot(h, w.astype(jnp.bfloat16),
                      preferred_element_type=jnp.float32)
        acc = acc.astype(epi_dtype) + b.astype(epi_dtype)
        h = _leaky_relu(acc).astype(jnp.bfloat16)
    w, b = params[-1]
    logits = jnp.dot(h, w.astype(jnp.bfloat16),
                     preferred_element_type=jnp.float32) + b
    return jax.nn.softmax(logits, axis=1)


if __name__ == "__main__":
    key = jax.random.PRNGKey(0)
    kx, kp = jax.random.split(key)

    B = 8
    x = jax.random.normal(kx, (B, 10), jnp.float32)
    params = init_params(kp)

    out = classifier_forward(x, params)
    out = jax.block_until_ready(out)

    ref = reference_forward(x, params)
    assert out.shape == (B, 4), out.shape
    # approx-reciprocal + bf16 matmuls + bf16 output store => looser tolerances
    assert jnp.allclose(jnp.sum(out, axis=1), 1.0, atol=5e-3)
    assert jnp.allclose(out, ref, atol=4e-3, rtol=2e-2), \
        float(jnp.max(jnp.abs(out - ref)))

    print("KERNEL_OK")
</pallas_src>

<mosaic_0001>
module attributes {stable_mosaic.version = 11 : i64} {
  func.func @classifier_kernel(%arg0: i32, %arg1: memref<8x10xf32, #tpu.memory_space<vmem>>, %arg2: memref<10x1024xbf16, #tpu.memory_space<vmem>>, %arg3: memref<1x1024xbf16, #tpu.memory_space<vmem>>, %arg4: memref<1024x512xbf16, #tpu.memory_space<vmem>>, %arg5: memref<1x512xbf16, #tpu.memory_space<vmem>>, %arg6: memref<512x128xbf16, #tpu.memory_space<vmem>>, %arg7: memref<1x128xbf16, #tpu.memory_space<vmem>>, %arg8: memref<128x128xbf16, #tpu.memory_space<vmem>>, %arg9: memref<1x128xbf16, #tpu.memory_space<vmem>>, %arg10: memref<128x128xbf16, #tpu.memory_space<vmem>>, %arg11: memref<1x128xbf16, #tpu.memory_space<vmem>>, %arg12: memref<128x128xbf16, #tpu.memory_space<vmem>>, %arg13: memref<1x128xf32, #tpu.memory_space<vmem>>, %arg14: memref<8x128xbf16, #tpu.memory_space<vmem>>) attributes {dimension_semantics = [#tpu.dimension_semantics<parallel>], iteration_bounds = array<i64: 1>, scalar_prefetch = 0 : i64, scratch_operands = 0 : i64, tpu.core_type = #tpu.core_type<tc>, window_params = [{transform_indices = @transform_0, window_bounds = array<i64: 8, 10>}, {pipeline_mode = #tpu.pipeline_mode<synchronous>, transform_indices = @transform_1, window_bounds = array<i64: 10, 1024>}, {pipeline_mode = #tpu.pipeline_mode<synchronous>, transform_indices = @transform_2, window_bounds = array<i64: 1, 1024>}, {pipeline_mode = #tpu.pipeline_mode<synchronous>, transform_indices = @transform_3, window_bounds = array<i64: 1024, 512>}, {pipeline_mode = #tpu.pipeline_mode<synchronous>, transform_indices = @transform_4, window_bounds = array<i64: 1, 512>}, {pipeline_mode = #tpu.pipeline_mode<synchronous>, transform_indices = @transform_5, window_bounds = array<i64: 512, 128>}, {pipeline_mode = #tpu.pipeline_mode<synchronous>, transform_indices = @transform_6, window_bounds = array<i64: 1, 128>}, {pipeline_mode = #tpu.pipeline_mode<synchronous>, transform_indices = @transform_7, window_bounds = array<i64: 128, 128>}, {pipeline_mode = #tpu.pipeline_mode<synchronous>, transform_indices = @transform_8, window_bounds = array<i64: 1, 128>}, {pipeline_mode = #tpu.pipeline_mode<synchronous>, transform_indices = @transform_9, window_bounds = array<i64: 128, 128>}, {pipeline_mode = #tpu.pipeline_mode<synchronous>, transform_indices = @transform_10, window_bounds = array<i64: 1, 128>}, {pipeline_mode = #tpu.pipeline_mode<synchronous>, transform_indices = @transform_11, window_bounds = array<i64: 128, 128>}, {pipeline_mode = #tpu.pipeline_mode<synchronous>, transform_indices = @transform_12, window_bounds = array<i64: 1, 128>}, {transform_indices = @transform_13, window_bounds = array<i64: 8, 128>}]} {
    %c0 = arith.constant 0 : index
    %c0_0 = arith.constant 0 : index
    %0 = vector.load %arg1[%c0, %c0_0] : memref<8x10xf32, #tpu.memory_space<vmem>>, vector<8x10xf32>
    %1 = arith.truncf %0 : vector<8x10xf32> to vector<8x10xbf16>
    %c0_1 = arith.constant 0 : index
    %c0_2 = arith.constant 0 : index
    %2 = vector.load %arg2[%c0_1, %c0_2] : memref<10x1024xbf16, #tpu.memory_space<vmem>>, vector<10x1024xbf16>
    %cst = arith.constant dense<0.000000e+00> : vector<8x1024xf32>
    %3 = tpu.matmul %1, %2, %cst {dimension_numbers = #tpu.dot_dimension_numbers<[1], [0], [0], [1], [0, 0, 1, 1], [], []>} : vector<8x10xbf16>, vector<10x1024xbf16>, vector<8x1024xf32> -> vector<8x1024xf32>
    %4 = arith.truncf %3 : vector<8x1024xf32> to vector<8x1024xbf16>
    %c0_3 = arith.constant 0 : index
    %c0_4 = arith.constant 0 : index
    %5 = vector.load %arg3[%c0_3, %c0_4] : memref<1x1024xbf16, #tpu.memory_space<vmem>>, vector<1x1024xbf16>
    %6 = vector.broadcast %5 : vector<1x1024xbf16> to vector<8x1024xbf16>
    %7 = arith.addf %4, %6 : vector<8x1024xbf16>
    %cst_5 = arith.constant 1.000980e-02 : bf16
    %8 = vector.broadcast %cst_5 : bf16 to vector<8x1024xbf16>
    %9 = arith.mulf %8, %7 : vector<8x1024xbf16>
    %10 = arith.maximumf %7, %9 : vector<8x1024xbf16>
    %c0_6 = arith.constant 0 : index
    %c0_7 = arith.constant 0 : index
    %11 = vector.load %arg4[%c0_6, %c0_7] : memref<1024x512xbf16, #tpu.memory_space<vmem>>, vector<1024x512xbf16>
    %cst_8 = arith.constant dense<0.000000e+00> : vector<8x512xf32>
    %12 = tpu.matmul %10, %11, %cst_8 {dimension_numbers = #tpu.dot_dimension_numbers<[1], [0], [0], [1], [0, 0, 1, 1], [], []>} : vector<8x1024xbf16>, vector<1024x512xbf16>, vector<8x512xf32> -> vector<8x512xf32>
    %13 = arith.truncf %12 : vector<8x512xf32> to vector<8x512xbf16>
    %c0_9 = arith.constant 0 : index
    %c0_10 = arith.constant 0 : index
    %14 = vector.load %arg5[%c0_9, %c0_10] : memref<1x512xbf16, #tpu.memory_space<vmem>>, vector<1x512xbf16>
    %15 = vector.broadcast %14 : vector<1x512xbf16> to vector<8x512xbf16>
    %16 = arith.addf %13, %15 : vector<8x512xbf16>
    %cst_11 = arith.constant 1.000980e-02 : bf16
    %17 = vector.broadcast %cst_11 : bf16 to vector<8x512xbf16>
    %18 = arith.mulf %17, %16 : vector<8x512xbf16>
    %19 = arith.maximumf %16, %18 : vector<8x512xbf16>
    %c0_12 = arith.constant 0 : index
    %c0_13 = arith.constant 0 : index
    %20 = vector.load %arg6[%c0_12, %c0_13] : memref<512x128xbf16, #tpu.memory_space<vmem>>, vector<512x128xbf16>
    %cst_14 = arith.constant dense<0.000000e+00> : vector<8x128xf32>
    %21 = tpu.matmul %19, %20, %cst_14 {dimension_numbers = #tpu.dot_dimension_numbers<[1], [0], [0], [1], [0, 0, 1, 1], [], []>} : vector<8x512xbf16>, vector<512x128xbf16>, vector<8x128xf32> -> vector<8x128xf32>
    %22 = arith.truncf %21 : vector<8x128xf32> to vector<8x128xbf16>
    %c0_15 = arith.constant 0 : index
    %c0_16 = arith.constant 0 : index
    %23 = vector.load %arg7[%c0_15, %c0_16] : memref<1x128xbf16, #tpu.memory_space<vmem>>, vector<1x128xbf16>
    %24 = vector.broadcast %23 : vector<1x128xbf16> to vector<8x128xbf16>
    %25 = arith.addf %22, %24 : vector<8x128xbf16>
    %cst_17 = arith.constant 1.000980e-02 : bf16
    %26 = vector.broadcast %cst_17 : bf16 to vector<8x128xbf16>
    %27 = arith.mulf %26, %25 : vector<8x128xbf16>
    %28 = arith.maximumf %25, %27 : vector<8x128xbf16>
    %c0_18 = arith.constant 0 : index
    %c0_19 = arith.constant 0 : index
    %29 = vector.load %arg8[%c0_18, %c0_19] : memref<128x128xbf16, #tpu.memory_space<vmem>>, vector<128x128xbf16>
    %cst_20 = arith.constant dense<0.000000e+00> : vector<8x128xf32>
    %30 = tpu.matmul %28, %29, %cst_20 {dimension_numbers = #tpu.dot_dimension_numbers<[1], [0], [0], [1], [0, 0, 1, 1], [], []>} : vector<8x128xbf16>, vector<128x128xbf16>, vector<8x128xf32> -> vector<8x128xf32>
    %31 = arith.truncf %30 : vector<8x128xf32> to vector<8x128xbf16>
    %c0_21 = arith.constant 0 : index
    %c0_22 = arith.constant 0 : index
    %32 = vector.load %arg9[%c0_21, %c0_22] : memref<1x128xbf16, #tpu.memory_space<vmem>>, vector<1x128xbf16>
    %33 = vector.broadcast %32 : vector<1x128xbf16> to vector<8x128xbf16>
    %34 = arith.addf %31, %33 : vector<8x128xbf16>
    %cst_23 = arith.constant 1.000980e-02 : bf16
    %35 = vector.broadcast %cst_23 : bf16 to vector<8x128xbf16>
    %36 = arith.mulf %35, %34 : vector<8x128xbf16>
    %37 = arith.maximumf %34, %36 : vector<8x128xbf16>
    %c0_24 = arith.constant 0 : index
    %c0_25 = arith.constant 0 : index
    %38 = vector.load %arg10[%c0_24, %c0_25] : memref<128x128xbf16, #tpu.memory_space<vmem>>, vector<128x128xbf16>
    %cst_26 = arith.constant dense<0.000000e+00> : vector<8x128xf32>
    %39 = tpu.matmul %37, %38, %cst_26 {dimension_numbers = #tpu.dot_dimension_numbers<[1], [0], [0], [1], [0, 0, 1, 1], [], []>} : vector<8x128xbf16>, vector<128x128xbf16>, vector<8x128xf32> -> vector<8x128xf32>
    %40 = arith.truncf %39 : vector<8x128xf32> to vector<8x128xbf16>
    %c0_27 = arith.constant 0 : index
    %c0_28 = arith.constant 0 : index
    %41 = vector.load %arg11[%c0_27, %c0_28] : memref<1x128xbf16, #tpu.memory_space<vmem>>, vector<1x128xbf16>
    %42 = vector.broadcast %41 : vector<1x128xbf16> to vector<8x128xbf16>
    %43 = arith.addf %40, %42 : vector<8x128xbf16>
    %cst_29 = arith.constant 1.000980e-02 : bf16
    %44 = vector.broadcast %cst_29 : bf16 to vector<8x128xbf16>
    %45 = arith.mulf %44, %43 : vector<8x128xbf16>
    %46 = arith.maximumf %43, %45 : vector<8x128xbf16>
    %c0_30 = arith.constant 0 : index
    %c0_31 = arith.constant 0 : index
    %47 = vector.load %arg12[%c0_30, %c0_31] : memref<128x128xbf16, #tpu.memory_space<vmem>>, vector<128x128xbf16>
    %cst_32 = arith.constant dense<0.000000e+00> : vector<8x128xf32>
    %48 = tpu.matmul %46, %47, %cst_32 {dimension_numbers = #tpu.dot_dimension_numbers<[1], [0], [0], [1], [0, 0, 1, 1], [], []>} : vector<8x128xbf16>, vector<128x128xbf16>, vector<8x128xf32> -> vector<8x128xf32>
    %c0_33 = arith.constant 0 : index
    %c0_34 = arith.constant 0 : index
    %49 = vector.load %arg13[%c0_33, %c0_34] : memref<1x128xf32, #tpu.memory_space<vmem>>, vector<1x128xf32>
    %50 = vector.broadcast %49 : vector<1x128xf32> to vector<8x128xf32>
    %51 = arith.addf %48, %50 : vector<8x128xf32>
    %cst_35 = arith.constant dense<0xFF800000> : vector<8xf32>
    %52 = vector.multi_reduction <maximumf>, %51, %cst_35 [1] : vector<8x128xf32> to vector<8xf32>
    %53 = vector.shape_cast %52 : vector<8xf32> to vector<8x1xf32>
    %54 = vector.broadcast %53 : vector<8x1xf32> to vector<8x128xf32>
    %55 = arith.subf %51, %54 : vector<8x128xf32>
    %56 = math.exp %55 : vector<8x128xf32>
    %cst_36 = arith.constant dense<0.000000e+00> : vector<8xf32>
    %57 = vector.multi_reduction <add>, %56, %cst_36 [1] : vector<8x128xf32> to vector<8xf32>
    %58 = vector.shape_cast %57 : vector<8xf32> to vector<8x1xf32>
    %59 = tpu.reciprocal %58 {approx = true} : vector<8x1xf32> -> vector<8x1xf32>
    %60 = vector.broadcast %59 : vector<8x1xf32> to vector<8x128xf32>
    %61 = arith.mulf %56, %60 : vector<8x128xf32>
    %62 = arith.truncf %61 : vector<8x128xf32> to vector<8x128xbf16>
    %c0_37 = arith.constant 0 : index
    %c0_38 = arith.constant 0 : index
    %63 = vector.load %arg14[%c0_37, %c0_38] : memref<8x128xbf16, #tpu.memory_space<vmem>>, vector<8x128xbf16>
    tpu.vector_store %arg14[%c0_37, %c0_38], %62 {strides = array<i32>} : memref<8x128xbf16, #tpu.memory_space<vmem>>, vector<8x128xbf16>,
    return
  }
  func.func @transform_0(%arg0: i32) -> (i32, i32) {
    %c0_i32 = arith.constant 0 : i32
    %c0_i32_0 = arith.constant 0 : i32
    return %arg0, %c0_i32 : i32, i32
  }
  func.func @transform_1(%arg0: i32) -> (i32, i32) {
    %c0_i32 = arith.constant 0 : i32
    %c0_i32_0 = arith.constant 0 : i32
    %c0_i32_1 = arith.constant 0 : i32
    return %c0_i32, %c0_i32_0 : i32, i32
  }
  func.func @transform_2(%arg0: i32) -> (i32, i32) {
    %c0_i32 = arith.constant 0 : i32
    %c0_i32_0 = arith.constant 0 : i32
    %c0_i32_1 = arith.constant 0 : i32
    return %c0_i32, %c0_i32_0 : i32, i32
  }
  func.func @transform_3(%arg0: i32) -> (i32, i32) {
    %c0_i32 = arith.constant 0 : i32
    %c0_i32_0 = arith.constant 0 : i32
    %c0_i32_1 = arith.constant 0 : i32
    return %c0_i32, %c0_i32_0 : i32, i32
  }
  func.func @transform_4(%arg0: i32) -> (i32, i32) {
    %c0_i32 = arith.constant 0 : i32
    %c0_i32_0 = arith.constant 0 : i32
    %c0_i32_1 = arith.constant 0 : i32
    return %c0_i32, %c0_i32_0 : i32, i32
  }
  func.func @transform_5(%arg0: i32) -> (i32, i32) {
    %c0_i32 = arith.constant 0 : i32
    %c0_i32_0 = arith.constant 0 : i32
    %c0_i32_1 = arith.constant 0 : i32
    return %c0_i32, %c0_i32_0 : i32, i32
  }
  func.func @transform_6(%arg0: i32) -> (i32, i32) {
    %c0_i32 = arith.constant 0 : i32
    %c0_i32_0 = arith.constant 0 : i32
    %c0_i32_1 = arith.constant 0 : i32
    return %c0_i32, %c0_i32_0 : i32, i32
  }
  func.func @transform_7(%arg0: i32) -> (i32, i32) {
    %c0_i32 = arith.constant 0 : i32
    %c0_i32_0 = arith.constant 0 : i32
    %c0_i32_1 = arith.constant 0 : i32
    return %c0_i32, %c0_i32_0 : i32, i32
  }
  func.func @transform_8(%arg0: i32) -> (i32, i32) {
    %c0_i32 = arith.constant 0 : i32
    %c0_i32_0 = arith.constant 0 : i32
    %c0_i32_1 = arith.constant 0 : i32
    return %c0_i32, %c0_i32_0 : i32, i32
  }
  func.func @transform_9(%arg0: i32) -> (i32, i32) {
    %c0_i32 = arith.constant 0 : i32
    %c0_i32_0 = arith.constant 0 : i32
    %c0_i32_1 = arith.constant 0 : i32
    return %c0_i32, %c0_i32_0 : i32, i32
  }
  func.func @transform_10(%arg0: i32) -> (i32, i32) {
    %c0_i32 = arith.constant 0 : i32
    %c0_i32_0 = arith.constant 0 : i32
    %c0_i32_1 = arith.constant 0 : i32
    return %c0_i32, %c0_i32_0 : i32, i32
  }
  func.func @transform_11(%arg0: i32) -> (i32, i32) {
    %c0_i32 = arith.constant 0 : i32
    %c0_i32_0 = arith.constant 0 : i32
    %c0_i32_1 = arith.constant 0 : i32
    return %c0_i32, %c0_i32_0 : i32, i32
  }
  func.func @transform_12(%arg0: i32) -> (i32, i32) {
    %c0_i32 = arith.constant 0 : i32
    %c0_i32_0 = arith.constant 0 : i32
    %c0_i32_1 = arith.constant 0 : i32
    return %c0_i32, %c0_i32_0 : i32, i32
  }
  func.func @transform_13(%arg0: i32) -> (i32, i32) {
    %c0_i32 = arith.constant 0 : i32
    %c0_i32_0 = arith.constant 0 : i32
    return %arg0, %c0_i32 : i32, i32
  }
}

</mosaic_0001>

<llo_original>
// kernel: tpu_custom_call.1
$region0: #{tpu_custom_call.1}
  #allocation0 [shape = 'u32[]', space=smem, size = 0x4, offset = 0x4, fixed_abs, tag = 'smem constant byte address 0x4 - core index']
  #allocation1 [shape = 'u32[144,128]{1,0:T(1,128)}', space=vmem, size = 0x12000, scoped, tag = 'internal scratch']
  %s0 = inlined_call_operand.hbm [shape: f32[8,10], index: 0, kind: input, shape index: {}]
  %s1 = inlined_call_operand.hbm [shape: bf16[10,1024], index: 1, kind: input, shape index: {}]
  %s2 = inlined_call_operand.hbm [shape: bf16[1,1024], index: 2, kind: input, shape index: {}]
  %s3 = inlined_call_operand.hbm [shape: bf16[1024,512], index: 3, kind: input, shape index: {}]
  %s4 = inlined_call_operand.vmem [shape: bf16[1,512], index: 4, kind: input, shape index: {}]
  %s5 = inlined_call_operand.hbm [shape: bf16[512,128], index: 5, kind: input, shape index: {}]
  %s6 = inlined_call_operand.vmem [shape: bf16[1,128], index: 6, kind: input, shape index: {}]
  %s7 = inlined_call_operand.hbm [shape: bf16[128,128], index: 7, kind: input, shape index: {}]
  %s8 = inlined_call_operand.vmem [shape: bf16[1,128], index: 8, kind: input, shape index: {}]
  %s9 = inlined_call_operand.hbm [shape: bf16[128,128], index: 9, kind: input, shape index: {}]
  %s10 = inlined_call_operand.vmem [shape: bf16[1,128], index: 10, kind: input, shape index: {}]
  %s11 = inlined_call_operand.hbm [shape: bf16[128,128], index: 11, kind: input, shape index: {}]
  %s12 = inlined_call_operand.vmem [shape: f32[1,128], index: 12, kind: input, shape index: {}]
  %s13 = inlined_call_operand.hbm [shape: bf16[8,128], index: 13, kind: output, shape index: {}]
  %s14 = sld [smem:[#allocation0]]
  $region94: #{tpu_custom_call.1} parent=0
    _
  %s16 = ssub.s32 1, %s14
  %s17 = scalar_select 0, %s16, %s14
  $region1: #{tpu_custom_call.1} parent=0
    #allocation2 [shape = 'u8[4096]{0}', space=vmem, size = 0x1000, scoped, tag = 'input window, operand 0, single buffered']
    #allocation3 [shape = 's32[1]{0}', space=sflag, size = 0x4, scoped, tag = 'scoped memory for tpu_custom_call.1']
    #allocation4 [shape = 's32[1]{0}', space=sflag, size = 0x4, scoped, tag = 'scoped memory for tpu_custom_call.1']
    #allocation5 [shape = 'u8[32768]{0}', space=vmem, size = 0x8000, scoped, tag = 'input window, operand 1, single buffered']
    #allocation6 [shape = 's32[1]{0}', space=sflag, size = 0x4, scoped, tag = 'scoped memory for tpu_custom_call.1']
    #allocation7 [shape = 'u8[4096]{0}', space=vmem, size = 0x1000, scoped, tag = 'input window, operand 2, single buffered']
    #allocation8 [shape = 'u8[1048576]{0}', space=vmem, size = 0x100000, scoped, tag = 'input window, operand 3, single buffered']
    #allocation9 [shape = 's32[1]{0}', space=sflag, size = 0x4, scoped, tag = 'scoped memory for tpu_custom_call.1']
    #allocation10 [shape = 'u8[131072]{0}', space=vmem, size = 0x20000, scoped, tag = 'input window, operand 5, single buffered']
    #allocation11 [shape = 'u8[32768]{0}', space=vmem, size = 0x8000, scoped, tag = 'input window, operand 7, single buffered']
    #allocation12 [shape = 's32[1]{0}', space=sflag, size = 0x4, scoped, tag = 'scoped memory for tpu_custom_call.1']
    #allocation13 [shape = 'u8[32768]{0}', space=vmem, size = 0x8000, scoped, tag = 'input window, operand 9, single buffered']
    #allocation14 [shape = 'u8[32768]{0}', space=vmem, size = 0x8000, scoped, tag = 'input window, operand 11, single buffered']
    #allocation15 [shape = 's32[1]{0}', space=sflag, size = 0x4, scoped, tag = 'scoped memory for tpu_custom_call.1']
    #allocation16 [shape = 'u8[2048]{0}', space=vmem, size = 0x800, scoped, tag = 'output window, operand 0, single buffered']
    %18 = vsyncpa [#allocation3], 0
    %19 = vsyncpa [#allocation6], 0
    %20 = vsyncpa [#allocation9], 0
    %21 = vsyncpa [#allocation12], 0
    %22 = vsyncpa [#allocation15], 0
    %23 = vsyncpa [#allocation4], 0
    // Predicated region
    $region2: #{tpu_custom_call.1} parent=1 // pred_check
      _
    $region3: #{tpu_custom_call.1} parent=1 // pred_check_branch
      %25 = sbr.rel (0) target = $region5
    $region4: #{tpu_custom_call.1} parent=1 // pred_region
      %s27 = ssub.s32 128, 128
      %28 = vsyncadd [#allocation3], %s27
      %s30 = sshll.u32 [#allocation2], 4
      %s31 = int_to_ptr.vmem [resolvable:$true] %s30
      %33 = dma.hbm_to_vmem [thread:$0]  %s0, 128, %s31, [#allocation3]
    $region5: #{tpu_custom_call.1} parent=1 // pred_fallthru
      _
    // Predicated region
    $region6: #{tpu_custom_call.1} parent=1 // pred_check
      _
    $region7: #{tpu_custom_call.1} parent=1 // pred_check_branch
      %35 = sbr.rel (0) target = $region9
    $region8: #{tpu_custom_call.1} parent=1 // pred_region
      %s37 = ssub.s32 1024, 1024
      %38 = vsyncadd [#allocation6], %s37
      %s39 = sshll.u32 [#allocation5], 4
      %s40 = int_to_ptr.vmem [resolvable:$true] %s39
      %45 = dma.hbm_to_vmem [thread:$0]  %s1, 1024, %s40, [#allocation6], 512, 512, 32
    $region9: #{tpu_custom_call.1} parent=1 // pred_fallthru
      _
    // Predicated region
    $region10: #{tpu_custom_call.1} parent=1 // pred_check
      _
    $region11: #{tpu_custom_call.1} parent=1 // pred_check_branch
      %47 = sbr.rel (0) target = $region13
    $region12: #{tpu_custom_call.1} parent=1 // pred_region
      %s49 = ssub.s32 128, 128
      %50 = vsyncadd [#allocation6], %s49
      %s52 = sshll.u32 [#allocation7], 4
      %s53 = int_to_ptr.vmem [resolvable:$true] %s52
      %55 = dma.hbm_to_vmem [thread:$0]  %s2, 128, %s53, [#allocation6]
    $region13: #{tpu_custom_call.1} parent=1 // pred_fallthru
      _
    // Predicated region
    $region14: #{tpu_custom_call.1} parent=1 // pred_check
      _
    $region15: #{tpu_custom_call.1} parent=1 // pred_check_branch
      %57 = sbr.rel (0) target = $region17
    $region16: #{tpu_custom_call.1} parent=1 // pred_region
      %s59 = ssub.s32 32768, 32768
      %60 = vsyncadd [#allocation9], %s59
      %s61 = sshll.u32 [#allocation8], 4
      %s62 = int_to_ptr.vmem [resolvable:$true] %s61
      %67 = dma.hbm_to_vmem [thread:$0]  %s3, 32768, %s62, [#allocation9], 256, 256, 16
    $region17: #{tpu_custom_call.1} parent=1 // pred_fallthru
      _
    // Predicated region
    $region18: #{tpu_custom_call.1} parent=1 // pred_check
      _
    $region19: #{tpu_custom_call.1} parent=1 // pred_check_branch
      %69 = sbr.rel (0) target = $region21
    $region20: #{tpu_custom_call.1} parent=1 // pred_region
      _
    $region21: #{tpu_custom_call.1} parent=1 // pred_fallthru
      _
    // Predicated region
    $region22: #{tpu_custom_call.1} parent=1 // pred_check
      _
    $region23: #{tpu_custom_call.1} parent=1 // pred_check_branch
      %71 = sbr.rel (0) target = $region25
    $region24: #{tpu_custom_call.1} parent=1 // pred_region
      %s73 = ssub.s32 4096, 4096
      %74 = vsyncadd [#allocation9], %s73
      %s75 = sshll.u32 [#allocation10], 4
      %s76 = int_to_ptr.vmem [resolvable:$true] %s75
      %81 = dma.hbm_to_vmem [thread:$0]  %s5, 4096, %s76, [#allocation9], 64, 64, 4
    $region25: #{tpu_custom_call.1} parent=1 // pred_fallthru
      _
    // Predicated region
    $region26: #{tpu_custom_call.1} parent=1 // pred_check
      _
    $region27: #{tpu_custom_call.1} parent=1 // pred_check_branch
      %83 = sbr.rel (0) target = $region29
    $region28: #{tpu_custom_call.1} parent=1 // pred_region
      _
    $region29: #{tpu_custom_call.1} parent=1 // pred_fallthru
      _
    // Predicated region
    $region30: #{tpu_custom_call.1} parent=1 // pred_check
      _
    $region31: #{tpu_custom_call.1} parent=1 // pred_check_branch
      %85 = sbr.rel (0) target = $region33
    $region32: #{tpu_custom_call.1} parent=1 // pred_region
      %s87 = ssub.s32 1024, 1024
      %88 = vsyncadd [#allocation12], %s87
      %s89 = sshll.u32 [#allocation11], 4
      %s90 = int_to_ptr.vmem [resolvable:$true] %s89
      %95 = dma.hbm_to_vmem [thread:$0]  %s7, 1024, %s90, [#allocation12], 64, 64, 4
    $region33: #{tpu_custom_call.1} parent=1 // pred_fallthru
      _
    // Predicated region
    $region34: #{tpu_custom_call.1} parent=1 // pred_check
      _
    $region35: #{tpu_custom_call.1} parent=1 // pred_check_branch
      %97 = sbr.rel (0) target = $region37
    $region36: #{tpu_custom_call.1} parent=1 // pred_region
      _
    $region37: #{tpu_custom_call.1} parent=1 // pred_fallthru
      _
    // Predicated region
    $region38: #{tpu_custom_call.1} parent=1 // pred_check
      _
    $region39: #{tpu_custom_call.1} parent=1 // pred_check_branch
      %99 = sbr.rel (0) target = $region41
    $region40: #{tpu_custom_call.1} parent=1 // pred_region
      %s101 = ssub.s32 1024, 1024
      %102 = vsyncadd [#allocation12], %s101
      %s103 = sshll.u32 [#allocation13], 4
      %s104 = int_to_ptr.vmem [resolvable:$true] %s103
      %109 = dma.hbm_to_vmem [thread:$0]  %s9, 1024, %s104, [#allocation12], 64, 64, 4
    $region41: #{tpu_custom_call.1} parent=1 // pred_fallthru
      _
    // Predicated region
    $region42: #{tpu_custom_call.1} parent=1 // pred_check
      _
    $region43: #{tpu_custom_call.1} parent=1 // pred_check_branch
      %111 = sbr.rel (0) target = $region45
    $region44: #{tpu_custom_call.1} parent=1 // pred_region
      _
    $region45: #{tpu_custom_call.1} parent=1 // pred_fallthru
      _
    // Predicated region
    $region46: #{tpu_custom_call.1} parent=1 // pred_check
      _
    $region47: #{tpu_custom_call.1} parent=1 // pred_check_branch
      %113 = sbr.rel (0) target = $region49
    $region48: #{tpu_custom_call.1} parent=1 // pred_region
      %s115 = ssub.s32 1024, 1024
      %116 = vsyncadd [#allocation15], %s115
      %s117 = sshll.u32 [#allocation14], 4
      %s118 = int_to_ptr.vmem [resolvable:$true] %s117
      %123 = dma.hbm_to_vmem [thread:$0]  %s11, 1024, %s118, [#allocation15], 64, 64, 4
    $region49: #{tpu_custom_call.1} parent=1 // pred_fallthru
      _
    // Predicated region
    $region50: #{tpu_custom_call.1} parent=1 // pred_check
      _
    $region51: #{tpu_custom_call.1} parent=1 // pred_check_branch
      %125 = sbr.rel (0) target = $region53
    $region52: #{tpu_custom_call.1} parent=1 // pred_region
      _
    $region53: #{tpu_custom_call.1} parent=1 // pred_fallthru
      _
    // Predicated region
    $region54: #{tpu_custom_call.1} parent=1 // pred_check
      _
    $region55: #{tpu_custom_call.1} parent=1 // pred_check_branch
      %127 = sbr.rel (0) target = $region57
    $region56: #{tpu_custom_call.1} parent=1 // pred_region
      %128 = dma.done [#allocation3], 128
    $region57: #{tpu_custom_call.1} parent=1 // pred_fallthru
      _
    // Predicated region
    $region58: #{tpu_custom_call.1} parent=1 // pred_check
      _
    $region59: #{tpu_custom_call.1} parent=1 // pred_check_branch
      %130 = sbr.rel (0) target = $region61
    $region60: #{tpu_custom_call.1} parent=1 // pred_region
      %131 = dma.done [#allocation6], 1024
    $region61: #{tpu_custom_call.1} parent=1 // pred_fallthru
      _
    // Predicated region
    $region62: #{tpu_custom_call.1} parent=1 // pred_check
      _
    $region63: #{tpu_custom_call.1} parent=1 // pred_check_branch
      %133 = sbr.rel (0) target = $region65
    $region64: #{tpu_custom_call.1} parent=1 // pred_region
      %134 = dma.done [#allocation6], 128
    $region65: #{tpu_custom_call.1} parent=1 // pred_fallthru
      _
    // Predicated region
    $region66: #{tpu_custom_call.1} parent=1 // pred_check
      _
    $region67: #{tpu_custom_call.1} parent=1 // pred_check_branch
      %136 = sbr.rel (0) target = $region69
    $region68: #{tpu_custom_call.1} parent=1 // pred_region
      %137 = dma.done [#allocation9], 32768
    $region69: #{tpu_custom_call.1} parent=1 // pred_fallthru
      _
    // Predicated region
    $region70: #{tpu_custom_call.1} parent=1 // pred_check
      _
    $region71: #{tpu_custom_call.1} parent=1 // pred_check_branch
      %139 = sbr.rel (0) target = $region73
    $region72: #{tpu_custom_call.1} parent=1 // pred_region
      %140 = dma.done [#allocation9], 4096
    $region73: #{tpu_custom_call.1} parent=1 // pred_fallthru
      _
    // Predicated region
    $region74: #{tpu_custom_call.1} parent=1 // pred_check
      _
    $region75: #{tpu_custom_call.1} parent=1 // pred_check_branch
      %142 = sbr.rel (0) target = $region77
    $region76: #{tpu_custom_call.1} parent=1 // pred_region
      %143 = dma.done [#allocation12], 1024
    $region77: #{tpu_custom_call.1} parent=1 // pred_fallthru
      _
    // Predicated region
    $region78: #{tpu_custom_call.1} parent=1 // pred_check
      _
    $region79: #{tpu_custom_call.1} parent=1 // pred_check_branch
      %145 = sbr.rel (0) target = $region81
    $region80: #{tpu_custom_call.1} parent=1 // pred_region
      %146 = dma.done [#allocation12], 1024
    $region81: #{tpu_custom_call.1} parent=1 // pred_fallthru
      _
    // Predicated region
    $region82: #{tpu_custom_call.1} parent=1 // pred_check
      _
    $region83: #{tpu_custom_call.1} parent=1 // pred_check_branch
      %148 = sbr.rel (0) target = $region85
    $region84: #{tpu_custom_call.1} parent=1 // pred_region
      %149 = dma.done [#allocation15], 1024
    $region85: #{tpu_custom_call.1} parent=1 // pred_fallthru
      _
    %v152 = vld [vmem:[#allocation2] sm:$0xff]
    %v153 = vpack.c.bf16 %v152, %v152
    %v154 = vld [vmem:[#allocation5] sm:$0xff]
    %v155 = vld [vmem:[#allocation5 + $0x8] sm:$0xff]
    %v156 = vld [vmem:[#allocation5 + $0x10] sm:$0xff]
    %v157 = vld [vmem:[#allocation5 + $0x18] sm:$0xff]
    %v158 = vld [vmem:[#allocation5 + $0x20] sm:$0x11]
    %v159 = vld [vmem:[#allocation5 + $0x28] sm:$0x11]
    %v160 = vld [vmem:[#allocation5 + $0x30] sm:$0x11]
    %v161 = vld [vmem:[#allocation5 + $0x38] sm:$0x11]
    %v170 = vunpack.c.l.b16 %v154
    %v171 = vunpack.c.h.b16 %v154
    %v172 = vunpack.c.l.b16 %v155
    %v173 = vunpack.c.h.b16 %v155
    %v174 = vunpack.c.l.b16 %v156
    %v175 = vunpack.c.h.b16 %v156
    %v176 = vunpack.c.l.b16 %v157
    %v177 = vunpack.c.h.b16 %v157
    %v178 = vunpack.c.l.b16 %v158
    %v179 = vunpack.c.h.b16 %v158
    %v180 = vunpack.c.l.b16 %v159
    %v181 = vunpack.c.h.b16 %v159
    %v182 = vunpack.c.l.b16 %v160
    %v183 = vunpack.c.h.b16 %v160
    %v184 = vunpack.c.l.b16 %v161
    %v185 = vunpack.c.h.b16 %v161
    %v186 = vpack.c.b16 %v178, %v170
    %v187 = vpack.c.b16 %v179, %v171
    %v188 = vpack.c.b16 %v180, %v172
    %v189 = vpack.c.b16 %v181, %v173
    %v190 = vpack.c.b16 %v182, %v174
    %v191 = vpack.c.b16 %v183, %v175
    %v192 = vpack.c.b16 %v184, %v176
    %v193 = vpack.c.b16 %v185, %v177
    %vm194 = vcmask 80896
    %v196 = vsel %vm194, %v153, 0
    %vm198 = vcmask 1044480
    %v200 = vsel %vm198, %v186, 0
    %v203 = vsel %vm198, %v187, 0
    %v206 = vsel %vm198, %v188, 0
    %v209 = vsel %vm198, %v189, 0
    %v212 = vsel %vm198, %v190, 0
    %v215 = vsel %vm198, %v191, 0
    %v218 = vsel %vm198, %v192, 0
    %v221 = vsel %vm198, %v193, 0
    %223 = vmatprep.subr.bf16.mxu0 %v203
    %224 = vmatpush1.bf16.msra.mxu0 %v200
    %225 = vmatprep.subr.bf16.mxu0 0
    %226 = vmatpush1.bf16.msra.mxu0 0
    %227 = vmatprep.subr.bf16.mxu0 0
    %228 = vmatpush1.bf16.msra.mxu0 0
    %229 = vmatprep.subr.bf16.mxu0 0
    %230 = vmatpush1.bf16.msra.mxu0 0
    %231 = vmatprep.subr.bf16.mxu0 0
    %232 = vmatpush1.bf16.msra.mxu0 0
    %233 = vmatprep.subr.bf16.mxu0 0
    %234 = vmatpush1.bf16.msra.mxu0 0
    %235 = vmatprep.subr.bf16.mxu0 0
    %236 = vmatpush1.bf16.msra.mxu0 0
    %237 = vmatprep.subr.bf16.mxu0 0
    %238 = vmatpush1.bf16.msra.mxu0 0
    %239 = vmatprep.subr.bf16.mxu0 0
    %240 = vmatpush1.bf16.msra.mxu0 0
    %241 = vmatprep.subr.bf16.mxu0 0
    %242 = vmatpush1.bf16.msra.mxu0 0
    %243 = vmatprep.subr.bf16.mxu0 0
    %244 = vmatpush1.bf16.msra.mxu0 0
    %245 = vmatprep.subr.bf16.mxu0 0
    %246 = vmatpush1.bf16.msra.mxu0 0
    %247 = vmatprep.subr.bf16.mxu0 0
    %248 = vmatpush1.bf16.msra.mxu0 0
    %249 = vmatprep.subr.bf16.mxu0 0
    %250 = vmatpush1.bf16.msra.mxu0 0
    %251 = vmatprep.subr.bf16.mxu0 0
    %252 = vmatpush1.bf16.msra.mxu0 0
    %253 = vmatprep.subr.bf16.mxu0 0
    %254 = vmatpush1.bf16.msra.mxu0 0
    %255 = vmatprep.mubr.bf16.mxu0 0
    %256 = vmatmul.mubr.bf16.gmra.mrb[0].mxu0 %v196
    %v257 = vpop.f32.mrb[0].mxu0
    %v258 = vadd.f32 0.0, %v257
    %v259 = vpop.f32.mrb[0].mxu0
    %v260 = vadd.f32 0.0, %v259
    %v261 = vpop.f32.mrb[0].mxu0
    %v262 = vpop.f32.mrb[0].mxu0
    %263 = vdwg.mxu0
    %264 = vmatprep.subr.bf16.mxu0 %v209
    %265 = vmatpush1.bf16.msra.mxu0 %v206
    %266 = vmatprep.subr.bf16.mxu0 0
    %267 = vmatpush1.bf16.msra.mxu0 0
    %268 = vmatprep.subr.bf16.mxu0 0
    %269 = vmatpush1.bf16.msra.mxu0 0
    %270 = vmatprep.subr.bf16.mxu0 0
    %271 = vmatpush1.bf16.msra.mxu0 0
    %272 = vmatprep.subr.bf16.mxu0 0
    %273 = vmatpush1.bf16.msra.mxu0 0
    %274 = vmatprep.subr.bf16.mxu0 0
    %275 = vmatpush1.bf16.msra.mxu0 0
    %276 = vmatprep.subr.bf16.mxu0 0
    %277 = vmatpush1.bf16.msra.mxu0 0
    %278 = vmatprep.subr.bf16.mxu0 0
    %279 = vmatpush1.bf16.msra.mxu0 0
    %280 = vmatprep.subr.bf16.mxu0 0
    %281 = vmatpush1.bf16.msra.mxu0 0
    %282 = vmatprep.subr.bf16.mxu0 0
    %283 = vmatpush1.bf16.msra.mxu0 0
    %284 = vmatprep.subr.bf16.mxu0 0
    %285 = vmatpush1.bf16.msra.mxu0 0
    %286 = vmatprep.subr.bf16.mxu0 0
    %287 = vmatpush1.bf16.msra.mxu0 0
    %288 = vmatprep.subr.bf16.mxu0 0
    %289 = vmatpush1.bf16.msra.mxu0 0
    %290 = vmatprep.subr.bf16.mxu0 0
    %291 = vmatpush1.bf16.msra.mxu0 0
    %292 = vmatprep.subr.bf16.mxu0 0
    %293 = vmatpush1.bf16.msra.mxu0 0
    %294 = vmatprep.subr.bf16.mxu0 0
    %295 = vmatpush1.bf16.msra.mxu0 0
    %296 = vmatprep.mubr.bf16.mxu0 0
    %297 = vmatmul.mubr.bf16.gmra.mrb[0].mxu0 %v196
    %v298 = vpop.f32.mrb[0].mxu0
    %v299 = vadd.f32 0.0, %v298
    %v300 = vpop.f32.mrb[0].mxu0
    %v301 = vadd.f32 0.0, %v300
    %v302 = vpop.f32.mrb[0].mxu0
    %v303 = vpop.f32.mrb[0].mxu0
    %304 = vdwg.mxu0
    %305 = vmatprep.subr.bf16.mxu0 %v215
    %306 = vmatpush1.bf16.msra.mxu0 %v212
    %307 = vmatprep.subr.bf16.mxu0 0
    %308 = vmatpush1.bf16.msra.mxu0 0
    %309 = vmatprep.subr.bf16.mxu0 0
    %310 = vmatpush1.bf16.msra.mxu0 0
    %311 = vmatprep.subr.bf16.mxu0 0
    %312 = vmatpush1.bf16.msra.mxu0 0
    %313 = vmatprep.subr.bf16.mxu0 0
    %314 = vmatpush1.bf16.msra.mxu0 0
    %315 = vmatprep.subr.bf16.mxu0 0
    %316 = vmatpush1.bf16.msra.mxu0 0
    %317 = vmatprep.subr.bf16.mxu0 0
    %318 = vmatpush1.bf16.msra.mxu0 0
    %319 = vmatprep.subr.bf16.mxu0 0
    %320 = vmatpush1.bf16.msra.mxu0 0
    %321 = vmatprep.subr.bf16.mxu0 0
    %322 = vmatpush1.bf16.msra.mxu0 0
    %323 = vmatprep.subr.bf16.mxu0 0
    %324 = vmatpush1.bf16.msra.mxu0 0
    %325 = vmatprep.subr.bf16.mxu0 0
    %326 = vmatpush1.bf16.msra.mxu0 0
    %327 = vmatprep.subr.bf16.mxu0 0
    %328 = vmatpush1.bf16.msra.mxu0 0
    %329 = vmatprep.subr.bf16.mxu0 0
    %330 = vmatpush1.bf16.msra.mxu0 0
    %331 = vmatprep.subr.bf16.mxu0 0
    %332 = vmatpush1.bf16.msra.mxu0 0
    %333 = vmatprep.subr.bf16.mxu0 0
    %334 = vmatpush1.bf16.msra.mxu0 0
    %335 = vmatprep.subr.bf16.mxu0 0
    %336 = vmatpush1.bf16.msra.mxu0 0
    %337 = vmatprep.mubr.bf16.mxu0 0
    %338 = vmatmul.mubr.bf16.gmra.mrb[0].mxu0 %v196
    %v339 = vpop.f32.mrb[0].mxu0
    %v340 = vadd.f32 0.0, %v339
    %v341 = vpop.f32.mrb[0].mxu0
    %v342 = vadd.f32 0.0, %v341
    %v343 = vpop.f32.mrb[0].mxu0
    %v344 = vpop.f32.mrb[0].mxu0
    %345 = vdwg.mxu0
    %346 = vmatprep.subr.bf16.mxu0 %v221
    %347 = vmatpush1.bf16.msra.mxu0 %v218
    %348 = vmatprep.subr.bf16.mxu0 0
    %349 = vmatpush1.bf16.msra.mxu0 0
    %350 = vmatprep.subr.bf16.mxu0 0
    %351 = vmatpush1.bf16.msra.mxu0 0
    %352 = vmatprep.subr.bf16.mxu0 0
    %353 = vmatpush1.bf16.msra.mxu0 0
    %354 = vmatprep.subr.bf16.mxu0 0
    %355 = vmatpush1.bf16.msra.mxu0 0
    %356 = vmatprep.subr.bf16.mxu0 0
    %357 = vmatpush1.bf16.msra.mxu0 0
    %358 = vmatprep.subr.bf16.mxu0 0
    %359 = vmatpush1.bf16.msra.mxu0 0
    %360 = vmatprep.subr.bf16.mxu0 0
    %361 = vmatpush1.bf16.msra.mxu0 0
    %362 = vmatprep.subr.bf16.mxu0 0
    %363 = vmatpush1.bf16.msra.mxu0 0
    %364 = vmatprep.subr.bf16.mxu0 0
    %365 = vmatpush1.bf16.msra.mxu0 0
    %366 = vmatprep.subr.bf16.mxu0 0
    %367 = vmatpush1.bf16.msra.mxu0 0
    %368 = vmatprep.subr.bf16.mxu0 0
    %369 = vmatpush1.bf16.msra.mxu0 0
    %370 = vmatprep.subr.bf16.mxu0 0
    %371 = vmatpush1.bf16.msra.mxu0 0
    %372 = vmatprep.subr.bf16.mxu0 0
    %373 = vmatpush1.bf16.msra.mxu0 0
    %374 = vmatprep.subr.bf16.mxu0 0
    %375 = vmatpush1.bf16.msra.mxu0 0
    %376 = vmatprep.subr.bf16.mxu0 0
    %377 = vmatpush1.bf16.msra.mxu0 0
    %378 = vmatprep.mubr.bf16.mxu0 0
    %379 = vmatmul.mubr.bf16.gmra.mrb[0].mxu0 %v196
    %v380 = vpop.f32.mrb[0].mxu0
    %v381 = vadd.f32 0.0, %v380
    %v382 = vpop.f32.mrb[0].mxu0
    %v383 = vadd.f32 0.0, %v382
    %v384 = vpop.f32.mrb[0].mxu0
    %v385 = vpop.f32.mrb[0].mxu0
    %386 = vdwg.mxu0
    %v387 = vpack.c.bf16 %v258, %v258
    %v388 = vpack.c.bf16 %v260, %v260
    %v389 = vpack.c.bf16 %v299, %v299
    %v390 = vpack.c.bf16 %v301, %v301
    %v391 = vpack.c.bf16 %v340, %v340
    %v392 = vpack.c.bf16 %v342, %v342
    %v393 = vpack.c.bf16 %v381, %v381
    %v394 = vpack.c.bf16 %v383, %v383
    %v395 = vld [vmem:[#allocation7] sm:$0xff]
    %v397 = vcombine.high %v395, %v395
    %v399 = vunpack.c.l.s4 1966171168
    %v400 = vunpack.c.0.s8 %v399
    %v401 = vlaneseq
    %v402 = vshrl.u32 %v401, 7
    %v403 = vsub.s32 %v400, %v402
    %v404 = vrot.slane %v395, %v403
    %v406 = vunpack.c.l.s4 1966171168
    %v407 = vunpack.c.0.s8 %v406
    %v408 = vlaneseq
    %v409 = vshrl.u32 %v408, 7
    %v410 = vsub.s32 %v407, %v409
    %v411 = vrot.slane %v397, %v410
    %v412 = vcombine.high %v404, %v404
    %v413 = vcombine.high %v411, %v411
    %v415 = vunpack.c.l.s4 1966171168
    %v416 = vunpack.c.0.s8 %v415
    %v417 = vlaneseq
    %v418 = vshrl.u32 %v417, 7
    %v419 = vsub.s32 %v416, %v418
    %v420 = vrot.slane %v404, %v419
    %v422 = vunpack.c.l.s4 1966171168
    %v423 = vunpack.c.0.s8 %v422
    %v424 = vlaneseq
    %v425 = vshrl.u32 %v424, 7
    %v426 = vsub.s32 %v423, %v425
    %v427 = vrot.slane %v411, %v426
    %v429 = vunpack.c.l.s4 1966171168
    %v430 = vunpack.c.0.s8 %v429
    %v431 = vlaneseq
    %v432 = vshrl.u32 %v431, 7
    %v433 = vsub.s32 %v430, %v432
    %v434 = vrot.slane %v412, %v433
    %v436 = vunpack.c.l.s4 1966171168
    %v437 = vunpack.c.0.s8 %v436
    %v438 = vlaneseq
    %v439 = vshrl.u32 %v438, 7
    %v440 = vsub.s32 %v437, %v439
    %v441 = vrot.slane %v413, %v440
    %v442 = vcombine.high %v420, %v420
    %v443 = vcombine.high %v427, %v427
    %v444 = vcombine.high %v434, %v434
    %v445 = vcombine.high %v441, %v441
    %v447 = vpack.i.b16 %v420, %v420
    %v449 = vlaneseq
    %v450 = vshrl.u32 %v449, 7
    %v451 = vsub.s32 0, %v450
    %v452 = vrot.slane %v447, %v451
    %v454 = vpack.i.b16 %v434, %v434
    %v456 = vlaneseq
    %v457 = vshrl.u32 %v456, 7
    %v458 = vsub.s32 0, %v457
    %v459 = vrot.slane %v454, %v458
    %v461 = vpack.i.b16 %v442, %v442
    %v463 = vlaneseq
    %v464 = vshrl.u32 %v463, 7
    %v465 = vsub.s32 0, %v464
    %v466 = vrot.slane %v461, %v465
    %v468 = vpack.i.b16 %v444, %v444
    %v470 = vlaneseq
    %v471 = vshrl.u32 %v470, 7
    %v472 = vsub.s32 0, %v471
    %v473 = vrot.slane %v468, %v472
    %v475 = vpack.i.b16 %v427, %v427
    %v477 = vlaneseq
    %v478 = vshrl.u32 %v477, 7
    %v479 = vsub.s32 0, %v478
    %v480 = vrot.slane %v475, %v479
    %v482 = vpack.i.b16 %v441, %v441
    %v484 = vlaneseq
    %v485 = vshrl.u32 %v484, 7
    %v486 = vsub.s32 0, %v485
    %v487 = vrot.slane %v482, %v486
    %v489 = vpack.i.b16 %v443, %v443
    %v491 = vlaneseq
    %v492 = vshrl.u32 %v491, 7
    %v493 = vsub.s32 0, %v492
    %v494 = vrot.slane %v489, %v493
    %v496 = vpack.i.b16 %v445, %v445
    %v498 = vlaneseq
    %v499 = vshrl.u32 %v498, 7
    %v500 = vsub.s32 0, %v499
    %v501 = vrot.slane %v496, %v500
    %v502 = vadd.bf16 %v387, %v452
    %v503 = vadd.bf16 %v388, %v459
    %v504 = vadd.bf16 %v389, %v466
    %v505 = vadd.bf16 %v390, %v473
    %v506 = vadd.bf16 %v391, %v480
    %v507 = vadd.bf16 %v392, %v487
    %v508 = vadd.bf16 %v393, %v494
    %v509 = vadd.bf16 %v394, %v501
    %v510 = vmul.bf16 %v502, 1009007652
    %v511 = vmul.bf16 %v503, 1009007652
    %v512 = vmul.bf16 %v504, 1009007652
    %v513 = vmul.bf16 %v505, 1009007652
    %v514 = vmul.bf16 %v506, 1009007652
    %v515 = vmul.bf16 %v507, 1009007652
    %v516 = vmul.bf16 %v508, 1009007652
    %v517 = vmul.bf16 %v509, 1009007652
    %v518 = vmax.bf16 %v502, %v510
    %v519 = vmax.bf16 %v503, %v511
    %v520 = vmax.bf16 %v504, %v512
    %v521 = vmax.bf16 %v505, %v513
    %v522 = vmax.bf16 %v506, %v514
    %v523 = vmax.bf16 %v507, %v515
    %v524 = vmax.bf16 %v508, %v516
    %v525 = vmax.bf16 %v509, %v517
    %v526 = vld [vmem:[#allocation8] sm:$0xff]
    %v527 = vld [vmem:[#allocation8 + $0x8] sm:$0xff]
    %v528 = vld [vmem:[#allocation8 + $0x10] sm:$0xff]
    %v529 = vld [vmem:[#allocation8 + $0x18] sm:$0xff]
    %v530 = vld [vmem:[#allocation8 + $0x20] sm:$0xff]
    %v531 = vld [vmem:[#allocation8 + $0x28] sm:$0xff]
    %v532 = vld [vmem:[#allocation8 + $0x30] sm:$0xff]
    %v533 = vld [vmem:[#allocation8 + $0x38] sm:$0xff]
    %v534 = vld [vmem:[#allocation8 + $0x40] sm:$0xff]
    %v535 = vld [vmem:[#allocation8 + $0x48] sm:$0xff]
    %v536 = vld [vmem:[#allocation8 + $0x50] sm:$0xff]
    %v537 = vld [vmem:[#allocation8 + $0x58] sm:$0xff]
    %v538 = vld [vmem:[#allocation8 + $0x60] sm:$0xff]
    %v539 = vld [vmem:[#allocation8 + $0x68] sm:$0xff]
    %v540 = vld [vmem:[#allocation8 + $0x70] sm:$0xff]
    %v541 = vld [vmem:[#allocation8 + $0x78] sm:$0xff]
    %v542 = vld [vmem:[#allocation8 + $0x80] sm:$0xff]
    %v543 = vld [vmem:[#allocation8 + $0x88] sm:$0xff]
    %v544 = vld [vmem:[#allocation8 + $0x90] sm:$0xff]
    %v545 = vld [vmem:[#allocation8 + $0x98] sm:$0xff]
    %v546 = vld [vmem:[#allocation8 + $0xa0] sm:$0xff]
    %v547 = vld [vmem:[#allocation8 + $0xa8] sm:$0xff]
    %v548 = vld [vmem:[#allocation8 + $0xb0] sm:$0xff]
    %v549 = vld [vmem:[#allocation8 + $0xb8] sm:$0xff]
    %v550 = vld [vmem:[#allocation8 + $0xc0] sm:$0xff]
    %v551 = vld [vmem:[#allocation8 + $0xc8] sm:$0xff]
    %v552 = vld [vmem:[#allocation8 + $0xd0] sm:$0xff]
    %v553 = vld [vmem:[#allocation8 + $0xd8] sm:$0xff]
    %v554 = vld [vmem:[#allocation8 + $0xe0] sm:$0xff]
    %v555 = vld [vmem:[#allocation8 + $0xe8] sm:$0xff]
    %v556 = vld [vmem:[#allocation8 + $0xf0] sm:$0xff]
    %v557 = vld [vmem:[#allocation8 + $0xf8] sm:$0xff]
    %v558 = vld [vmem:[#allocation8 + $0x100] sm:$0xff]
    %v559 = vld [vmem:[#allocation8 + $0x108] sm:$0xff]
    %v560 = vld [vmem:[#allocation8 + $0x110] sm:$0xff]
    %v561 = vld [vmem:[#allocation8 + $0x118] sm:$0xff]
    %v562 = vld [vmem:[#allocation8 + $0x120] sm:$0xff]
    %v563 = vld [vmem:[#allocation8 + $0x128] sm:$0xff]
    %v564 = vld [vmem:[#allocation8 + $0x130] sm:$0xff]
    %v565 = vld [vmem:[#allocation8 + $0x138] sm:$0xff]
    %v566 = vld [vmem:[#allocation8 + $0x140] sm:$0xff]
    %v567 = vld [vmem:[#allocation8 + $0x148] sm:$0xff]
    %v568 = vld [vmem:[#allocation8 + $0x150] sm:$0xff]
    %v569 = vld [vmem:[#allocation8 + $0x158] sm:$0xff]
    %v570 = vld [vmem:[#allocation8 + $0x160] sm:$0xff]
    %v571 = vld [vmem:[#allocation8 + $0x168] sm:$0xff]
    %v572 = vld [vmem:[#allocation8 + $0x170] sm:$0xff]
    %v573 = vld [vmem:[#allocation8 + $0x178] sm:$0xff]
    %v574 = vld [vmem:[#allocation8 + $0x180] sm:$0xff]
    %v575 = vld [vmem:[#allocation8 + $0x188] sm:$0xff]
    %v576 = vld [vmem:[#allocation8 + $0x190] sm:$0xff]
    %v577 = vld [vmem:[#allocation8 + $0x198] sm:$0xff]
    %v578 = vld [vmem:[#allocation8 + $0x1a0] sm:$0xff]
    %v579 = vld [vmem:[#allocation8 + $0x1a8] sm:$0xff]
    %v580 = vld [vmem:[#allocation8 + $0x1b0] sm:$0xff]
    %v581 = vld [vmem:[#allocation8 + $0x1b8] sm:$0xff]
    %v582 = vld [vmem:[#allocation8 + $0x1c0] sm:$0xff]
    %v583 = vld [vmem:[#allocation8 + $0x1c8] sm:$0xff]
    %v584 = vld [vmem:[#allocation8 + $0x1d0] sm:$0xff]
    %v585 = vld [vmem:[#allocation8 + $0x1d8] sm:$0xff]
    %v586 = vld [vmem:[#allocation8 + $0x1e0] sm:$0xff]
    %v587 = vld [vmem:[#allocation8 + $0x1e8] sm:$0xff]
    %v588 = vld [vmem:[#allocation8 + $0x1f0] sm:$0xff]
    %v589 = vld [vmem:[#allocation8 + $0x1f8] sm:$0xff]
    %v590 = vld [vmem:[#allocation8 + $0x200] sm:$0xff]
    %v591 = vld [vmem:[#allocation8 + $0x208] sm:$0xff]
    %v592 = vld [vmem:[#allocation8 + $0x210] sm:$0xff]
    %v593 = vld [vmem:[#allocation8 + $0x218] sm:$0xff]
    %v594 = vld [vmem:[#allocation8 + $0x220] sm:$0xff]
    %v595 = vld [vmem:[#allocation8 + $0x228] sm:$0xff]
    %v596 = vld [vmem:[#allocation8 + $0x230] sm:$0xff]
    %v597 = vld [vmem:[#allocation8 + $0x238] sm:$0xff]
    %v598 = vld [vmem:[#allocation8 + $0x240] sm:$0xff]
    %v599 = vld [vmem:[#allocation8 + $0x248] sm:$0xff]
    %v600 = vld [vmem:[#allocation8 + $0x250] sm:$0xff]
    %v601 = vld [vmem:[#allocation8 + $0x258] sm:$0xff]
    %v602 = vld [vmem:[#allocation8 + $0x260] sm:$0xff]
    %v603 = vld [vmem:[#allocation8 + $0x268] sm:$0xff]
    %v604 = vld [vmem:[#allocation8 + $0x270] sm:$0xff]
    %v605 = vld [vmem:[#allocation8 + $0x278] sm:$0xff]
    %v606 = vld [vmem:[#allocation8 + $0x280] sm:$0xff]
    %v607 = vld [vmem:[#allocation8 + $0x288] sm:$0xff]
    %v608 = vld [vmem:[#allocation8 + $0x290] sm:$0xff]
    %v609 = vld [vmem:[#allocation8 + $0x298] sm:$0xff]
    %v610 = vld [vmem:[#allocation8 + $0x2a0] sm:$0xff]
    %v611 = vld [vmem:[#allocation8 + $0x2a8] sm:$0xff]
    %v612 = vld [vmem:[#allocation8 + $0x2b0] sm:$0xff]
    %v613 = vld [vmem:[#allocation8 + $0x2b8] sm:$0xff]
    %v614 = vld [vmem:[#allocation8 + $0x2c0] sm:$0xff]
    %v615 = vld [vmem:[#allocation8 + $0x2c8] sm:$0xff]
    %v616 = vld [vmem:[#allocation8 + $0x2d0] sm:$0xff]
    %v617 = vld [vmem:[#allocation8 + $0x2d8] sm:$0xff]
    %v618 = vld [vmem:[#allocation8 + $0x2e0] sm:$0xff]
    %v619 = vld [vmem:[#allocation8 + $0x2e8] sm:$0xff]
    %v620 = vld [vmem:[#allocation8 + $0x2f0] sm:$0xff]
    %v621 = vld [vmem:[#allocation8 + $0x2f8] sm:$0xff]
    %v622 = vld [vmem:[#allocation8 + $0x300] sm:$0xff]
    %v623 = vld [vmem:[#allocation8 + $0x308] sm:$0xff]
    %v624 = vld [vmem:[#allocation8 + $0x310] sm:$0xff]
    %v625 = vld [vmem:[#allocation8 + $0x318] sm:$0xff]
    %v626 = vld [vmem:[#allocation8 + $0x320] sm:$0xff]
    %v627 = vld [vmem:[#allocation8 + $0x328] sm:$0xff]
    %v628 = vld [vmem:[#allocation8 + $0x330] sm:$0xff]
    %v629 = vld [vmem:[#allocation8 + $0x338] sm:$0xff]
    %v630 = vld [vmem:[#allocation8 + $0x340] sm:$0xff]
    %v631 = vld [vmem:[#allocation8 + $0x348] sm:$0xff]
    %v632 = vld [vmem:[#allocation8 + $0x350] sm:$0xff]
    %v633 = vld [vmem:[#allocation8 + $0x358] sm:$0xff]
    %v634 = vld [vmem:[#allocation8 + $0x360] sm:$0xff]
    %v635 = vld [vmem:[#allocation8 + $0x368] sm:$0xff]
    %v636 = vld [vmem:[#allocation8 + $0x370] sm:$0xff]
    %v637 = vld [vmem:[#allocation8 + $0x378] sm:$0xff]
    %v638 = vld [vmem:[#allocation8 + $0x380] sm:$0xff]
    %v639 = vld [vmem:[#allocation8 + $0x388] sm:$0xff]
    %v640 = vld [vmem:[#allocation8 + $0x390] sm:$0xff]
    %v641 = vld [vmem:[#allocation8 + $0x398] sm:$0xff]
    %v642 = vld [vmem:[#allocation8 + $0x3a0] sm:$0xff]
    %v643 = vld [vmem:[#allocation8 + $0x3a8] sm:$0xff]
    %v644 = vld [vmem:[#allocation8 + $0x3b0] sm:$0xff]
    %v645 = vld [vmem:[#allocation8 + $0x3b8] sm:$0xff]
    %v646 = vld [vmem:[#allocation8 + $0x3c0] sm:$0xff]
    %v647 = vld [vmem:[#allocation8 + $0x3c8] sm:$0xff]
    %v648 = vld [vmem:[#allocation8 + $0x3d0] sm:$0xff]
    %v649 = vld [vmem:[#allocation8 + $0x3d8] sm:$0xff]
    %v650 = vld [vmem:[#allocation8 + $0x3e0] sm:$0xff]
    %v651 = vld [vmem:[#allocation8 + $0x3e8] sm:$0xff]
    %v652 = vld [vmem:[#allocation8 + $0x3f0] sm:$0xff]
    %v653 = vld [vmem:[#allocation8 + $0x3f8] sm:$0xff]
    %v654 = vld [vmem:[#allocation8 + $0x400] sm:$0xff]
    %v655 = vld [vmem:[#allocation8 + $0x408] sm:$0xff]
    %v656 = vld [vmem:[#allocation8 + $0x410] sm:$0xff]
    %v657 = vld [vmem:[#allocation8 + $0x418] sm:$0xff]
    %v658 = vld [vmem:[#allocation8 + $0x420] sm:$0xff]
    %v659 = vld [vmem:[#allocation8 + $0x428] sm:$0xff]
    %v660 = vld [vmem:[#allocation8 + $0x430] sm:$0xff]
    %v661 = vld [vmem:[#allocation8 + $0x438] sm:$0xff]
    %v662 = vld [vmem:[#allocation8 + $0x440] sm:$0xff]
    %v663 = vld [vmem:[#allocation8 + $0x448] sm:$0xff]
    %v664 = vld [vmem:[#allocation8 + $0x450] sm:$0xff]
    %v665 = vld [vmem:[#allocation8 + $0x458] sm:$0xff]
    %v666 = vld [vmem:[#allocation8 + $0x460] sm:$0xff]
    %v667 = vld [vmem:[#allocation8 + $0x468] sm:$0xff]
    %v668 = vld [vmem:[#allocation8 + $0x470] sm:$0xff]
    %v669 = vld [vmem:[#allocation8 + $0x478] sm:$0xff]
    %v670 = vld [vmem:[#allocation8 + $0x480] sm:$0xff]
    %v671 = vld [vmem:[#allocation8 + $0x488] sm:$0xff]
    %v672 = vld [vmem:[#allocation8 + $0x490] sm:$0xff]
    %v673 = vld [vmem:[#allocation8 + $0x498] sm:$0xff]
    %v674 = vld [vmem:[#allocation8 + $0x4a0] sm:$0xff]
    %v675 = vld [vmem:[#allocation8 + $0x4a8] sm:$0xff]
    %v676 = vld [vmem:[#allocation8 + $0x4b0] sm:$0xff]
    %v677 = vld [vmem:[#allocation8 + $0x4b8] sm:$0xff]
    %v678 = vld [vmem:[#allocation8 + $0x4c0] sm:$0xff]
    %v679 = vld [vmem:[#allocation8 + $0x4c8] sm:$0xff]
    %v680 = vld [vmem:[#allocation8 + $0x4d0] sm:$0xff]
    %v681 = vld [vmem:[#allocation8 + $0x4d8] sm:$0xff]
    %v682 = vld [vmem:[#allocation8 + $0x4e0] sm:$0xff]
    %v683 = vld [vmem:[#allocation8 + $0x4e8] sm:$0xff]
    %v684 = vld [vmem:[#allocation8 + $0x4f0] sm:$0xff]
    %v685 = vld [vmem:[#allocation8 + $0x4f8] sm:$0xff]
    %v686 = vld [vmem:[#allocation8 + $0x500] sm:$0xff]
    %v687 = vld [vmem:[#allocation8 + $0x508] sm:$0xff]
    %v688 = vld [vmem:[#allocation8 + $0x510] sm:$0xff]
    %v689 = vld [vmem:[#allocation8 + $0x518] sm:$0xff]
    %v690 = vld [vmem:[#allocation8 + $0x520] sm:$0xff]
    %v691 = vld [vmem:[#allocation8 + $0x528] sm:$0xff]
    %v692 = vld [vmem:[#allocation8 + $0x530] sm:$0xff]
    %v693 = vld [vmem:[#allocation8 + $0x538] sm:$0xff]
    %v694 = vld [vmem:[#allocation8 + $0x540] sm:$0xff]
    %v695 = vld [vmem:[#allocation8 + $0x548] sm:$0xff]
    %v696 = vld [vmem:[#allocation8 + $0x550] sm:$0xff]
    %v697 = vld [vmem:[#allocation8 + $0x558] sm:$0xff]
    %v698 = vld [vmem:[#allocation8 + $0x560] sm:$0xff]
    %v699 = vld [vmem:[#allocation8 + $0x568] sm:$0xff]
    %v700 = vld [vmem:[#allocation8 + $0x570] sm:$0xff]
    %v701 = vld [vmem:[#allocation8 + $0x578] sm:$0xff]
    %v702 = vld [vmem:[#allocation8 + $0x580] sm:$0xff]
    %v703 = vld [vmem:[#allocation8 + $0x588] sm:$0xff]
    %v704 = vld [vmem:[#allocation8 + $0x590] sm:$0xff]
    %v705 = vld [vmem:[#allocation8 + $0x598] sm:$0xff]
    %v706 = vld [vmem:[#allocation8 + $0x5a0] sm:$0xff]
    %v707 = vld [vmem:[#allocation8 + $0x5a8] sm:$0xff]
    %v708 = vld [vmem:[#allocation8 + $0x5b0] sm:$0xff]
    %v709 = vld [vmem:[#allocation8 + $0x5b8] sm:$0xff]
    %v710 = vld [vmem:[#allocation8 + $0x5c0] sm:$0xff]
    %v711 = vld [vmem:[#allocation8 + $0x5c8] sm:$0xff]
    %v712 = vld [vmem:[#allocation8 + $0x5d0] sm:$0xff]
    %v713 = vld [vmem:[#allocation8 + $0x5d8] sm:$0xff]
    %v714 = vld [vmem:[#allocation8 + $0x5e0] sm:$0xff]
    %v715 = vld [vmem:[#allocation8 + $0x5e8] sm:$0xff]
    %v716 = vld [vmem:[#allocation8 + $0x5f0] sm:$0xff]
    %v717 = vld [vmem:[#allocation8 + $0x5f8] sm:$0xff]
    %v718 = vld [vmem:[#allocation8 + $0x600] sm:$0xff]
    %v719 = vld [vmem:[#allocation8 + $0x608] sm:$0xff]
    %v720 = vld [vmem:[#allocation8 + $0x610] sm:$0xff]
    %v721 = vld [vmem:[#allocation8 + $0x618] sm:$0xff]
    %v722 = vld [vmem:[#allocation8 + $0x620] sm:$0xff]
    %v723 = vld [vmem:[#allocation8 + $0x628] sm:$0xff]
    %v724 = vld [vmem:[#allocation8 + $0x630] sm:$0xff]
    %v725 = vld [vmem:[#allocation8 + $0x638] sm:$0xff]
    %v726 = vld [vmem:[#allocation8 + $0x640] sm:$0xff]
    %v727 = vld [vmem:[#allocation8 + $0x648] sm:$0xff]
    %v728 = vld [vmem:[#allocation8 + $0x650] sm:$0xff]
    %v729 = vld [vmem:[#allocation8 + $0x658] sm:$0xff]
    %v730 = vld [vmem:[#allocation8 + $0x660] sm:$0xff]
    %v731 = vld [vmem:[#allocation8 + $0x668] sm:$0xff]
    %v732 = vld [vmem:[#allocation8 + $0x670] sm:$0xff]
    %v733 = vld [vmem:[#allocation8 + $0x678] sm:$0xff]
    %v734 = vld [vmem:[#allocation8 + $0x680] sm:$0xff]
    %v735 = vld [vmem:[#allocation8 + $0x688] sm:$0xff]
    %v736 = vld [vmem:[#allocation8 + $0x690] sm:$0xff]
    %v737 = vld [vmem:[#allocation8 + $0x698] sm:$0xff]
    %v738 = vld [vmem:[#allocation8 + $0x6a0] sm:$0xff]
    %v739 = vld [vmem:[#allocation8 + $0x6a8] sm:$0xff]
    %v740 = vld [vmem:[#allocation8 + $0x6b0] sm:$0xff]
    %v741 = vld [vmem:[#allocation8 + $0x6b8] sm:$0xff]
    %v742 = vld [vmem:[#allocation8 + $0x6c0] sm:$0xff]
    %v743 = vld [vmem:[#allocation8 + $0x6c8] sm:$0xff]
    %v744 = vld [vmem:[#allocation8 + $0x6d0] sm:$0xff]
    %v745 = vld [vmem:[#allocation8 + $0x6d8] sm:$0xff]
    %v746 = vld [vmem:[#allocation8 + $0x6e0] sm:$0xff]
    %v747 = vld [vmem:[#allocation8 + $0x6e8] sm:$0xff]
    %v748 = vld [vmem:[#allocation8 + $0x6f0] sm:$0xff]
    %v749 = vld [vmem:[#allocation8 + $0x6f8] sm:$0xff]
    %v750 = vld [vmem:[#allocation8 + $0x700] sm:$0xff]
    %v751 = vld [vmem:[#allocation8 + $0x708] sm:$0xff]
    %v752 = vld [vmem:[#allocation8 + $0x710] sm:$0xff]
    %v753 = vld [vmem:[#allocation8 + $0x718] sm:$0xff]
    %v754 = vld [vmem:[#allocation8 + $0x720] sm:$0xff]
    %v755 = vld [vmem:[#allocation8 + $0x728] sm:$0xff]
    %v756 = vld [vmem:[#allocation8 + $0x730] sm:$0xff]
    %v757 = vld [vmem:[#allocation8 + $0x738] sm:$0xff]
    %v758 = vld [vmem:[#allocation8 + $0x740] sm:$0xff]
    %v759 = vld [vmem:[#allocation8 + $0x748] sm:$0xff]
    %v760 = vld [vmem:[#allocation8 + $0x750] sm:$0xff]
    %v761 = vld [vmem:[#allocation8 + $0x758] sm:$0xff]
    %v762 = vld [vmem:[#allocation8 + $0x760] sm:$0xff]
    %v763 = vld [vmem:[#allocation8 + $0x768] sm:$0xff]
    %v764 = vld [vmem:[#allocation8 + $0x770] sm:$0xff]
    %v765 = vld [vmem:[#allocation8 + $0x778] sm:$0xff]
    %v766 = vld [vmem:[#allocation8 + $0x780] sm:$0xff]
    %v767 = vld [vmem:[#allocation8 + $0x788] sm:$0xff]
    %v768 = vld [vmem:[#allocation8 + $0x790] sm:$0xff]
    %v769 = vld [vmem:[#allocation8 + $0x798] sm:$0xff]
    %v770 = vld [vmem:[#allocation8 + $0x7a0] sm:$0xff]
    %v771 = vld [vmem:[#allocation8 + $0x7a8] sm:$0xff]
    %v772 = vld [vmem:[#allocation8 + $0x7b0] sm:$0xff]
    %v773 = vld [vmem:[#allocation8 + $0x7b8] sm:$0xff]
    %v774 = vld [vmem:[#allocation8 + $0x7c0] sm:$0xff]
    %v775 = vld [vmem:[#allocation8 + $0x7c8] sm:$0xff]
    %v776 = vld [vmem:[#allocation8 + $0x7d0] sm:$0xff]
    %v777 = vld [vmem:[#allocation8 + $0x7d8] sm:$0xff]
    %v778 = vld [vmem:[#allocation8 + $0x7e0] sm:$0xff]
    %v779 = vld [vmem:[#allocation8 + $0x7e8] sm:$0xff]
    %v780 = vld [vmem:[#allocation8 + $0x7f0] sm:$0xff]
    %v781 = vld [vmem:[#allocation8 + $0x7f8] sm:$0xff]
    %v1038 = vunpack.c.l.b16 %v526
    %v1039 = vunpack.c.h.b16 %v526
    %v1040 = vunpack.c.l.b16 %v527
    %v1041 = vunpack.c.h.b16 %v527
    %v1042 = vunpack.c.l.b16 %v528
    %v1043 = vunpack.c.h.b16 %v528
    %v1044 = vunpack.c.l.b16 %v529
    %v1045 = vunpack.c.h.b16 %v529
    %v1046 = vunpack.c.l.b16 %v530
    %v1047 = vunpack.c.h.b16 %v530
    %v1048 = vunpack.c.l.b16 %v531
    %v1049 = vunpack.c.h.b16 %v531
    %v1050 = vunpack.c.l.b16 %v532
    %v1051 = vunpack.c.h.b16 %v532
    %v1052 = vunpack.c.l.b16 %v533
    %v1053 = vunpack.c.h.b16 %v533
    %v1054 = vunpack.c.l.b16 %v534
    %v1055 = vunpack.c.h.b16 %v534
    %v1056 = vunpack.c.l.b16 %v535
    %v1057 = vunpack.c.h.b16 %v535
    %v1058 = vunpack.c.l.b16 %v536
    %v1059 = vunpack.c.h.b16 %v536
    %v1060 = vunpack.c.l.b16 %v537
    %v1061 = vunpack.c.h.b16 %v537
    %v1062 = vunpack.c.l.b16 %v538
    %v1063 = vunpack.c.h.b16 %v538
    %v1064 = vunpack.c.l.b16 %v539
    %v1065 = vunpack.c.h.b16 %v539
    %v1066 = vunpack.c.l.b16 %v540
    %v1067 = vunpack.c.h.b16 %v540
    %v1068 = vunpack.c.l.b16 %v541
    %v1069 = vunpack.c.h.b16 %v541
    %v1070 = vunpack.c.l.b16 %v542
    %v1071 = vunpack.c.h.b16 %v542
    %v1072 = vunpack.c.l.b16 %v543
    %v1073 = vunpack.c.h.b16 %v543
    %v1074 = vunpack.c.l.b16 %v544
    %v1075 = vunpack.c.h.b16 %v544
    %v1076 = vunpack.c.l.b16 %v545
    %v1077 = vunpack.c.h.b16 %v545
    %v1078 = vunpack.c.l.b16 %v546
    %v1079 = vunpack.c.h.b16 %v546
    %v1080 = vunpack.c.l.b16 %v547
    %v1081 = vunpack.c.h.b16 %v547
    %v1082 = vunpack.c.l.b16 %v548
    %v1083 = vunpack.c.h.b16 %v548
    %v1084 = vunpack.c.l.b16 %v549
    %v1085 = vunpack.c.h.b16 %v549
    %v1086 = vunpack.c.l.b16 %v550
    %v1087 = vunpack.c.h.b16 %v550
    %v1088 = vunpack.c.l.b16 %v551
    %v1089 = vunpack.c.h.b16 %v551
    %v1090 = vunpack.c.l.b16 %v552
    %v1091 = vunpack.c.h.b16 %v552
    %v1092 = vunpack.c.l.b16 %v553
    %v1093 = vunpack.c.h.b16 %v553
    %v1094 = vunpack.c.l.b16 %v554
    %v1095 = vunpack.c.h.b16 %v554
    %v1096 = vunpack.c.l.b16 %v555
    %v1097 = vunpack.c.h.b16 %v555
    %v1098 = vunpack.c.l.b16 %v556
    %v1099 = vunpack.c.h.b16 %v556
    %v1100 = vunpack.c.l.b16 %v557
    %v1101 = vunpack.c.h.b16 %v557
    %v1102 = vunpack.c.l.b16 %v558
    %v1103 = vunpack.c.h.b16 %v558
    %v1104 = vunpack.c.l.b16 %v559
    %v1105 = vunpack.c.h.b16 %v559
    %v1106 = vunpack.c.l.b16 %v560
    %v1107 = vunpack.c.h.b16 %v560
    %v1108 = vunpack.c.l.b16 %v561
    %v1109 = vunpack.c.h.b16 %v561
    %v1110 = vunpack.c.l.b16 %v562
    %v1111 = vunpack.c.h.b16 %v562
    %v1112 = vunpack.c.l.b16 %v563
    %v1113 = vunpack.c.h.b16 %v563
    %v1114 = vunpack.c.l.b16 %v564
    %v1115 = vunpack.c.h.b16 %v564
    %v1116 = vunpack.c.l.b16 %v565
    %v1117 = vunpack.c.h.b16 %v565
    %v1118 = vunpack.c.l.b16 %v566
    %v1119 = vunpack.c.h.b16 %v566
    %v1120 = vunpack.c.l.b16 %v567
    %v1121 = vunpack.c.h.b16 %v567
    %v1122 = vunpack.c.l.b16 %v568
    %v1123 = vunpack.c.h.b16 %v568
    %v1124 = vunpack.c.l.b16 %v569
    %v1125 = vunpack.c.h.b16 %v569
    %v1126 = vunpack.c.l.b16 %v570
    %v1127 = vunpack.c.h.b16 %v570
    %v1128 = vunpack.c.l.b16 %v571
    %v1129 = vunpack.c.h.b16 %v571
    %v1130 = vunpack.c.l.b16 %v572
    %v1131 = vunpack.c.h.b16 %v572
    %v1132 = vunpack.c.l.b16 %v573
    %v1133 = vunpack.c.h.b16 %v573
    %v1134 = vunpack.c.l.b16 %v574
    %v1135 = vunpack.c.h.b16 %v574
    %v1136 = vunpack.c.l.b16 %v575
    %v1137 = vunpack.c.h.b16 %v575
    %v1138 = vunpack.c.l.b16 %v576
    %v1139 = vunpack.c.h.b16 %v576
    %v1140 = vunpack.c.l.b16 %v577
    %v1141 = vunpack.c.h.b16 %v577
    %v1142 = vunpack.c.l.b16 %v578
    %v1143 = vunpack.c.h.b16 %v578
    %v1144 = vunpack.c.l.b16 %v579
    %v1145 = vunpack.c.h.b16 %v579
    %v1146 = vunpack.c.l.b16 %v580
    %v1147 = vunpack.c.h.b16 %v580
    %v1148 = vunpack.c.l.b16 %v581
    %v1149 = vunpack.c.h.b16 %v581
    %v1150 = vunpack.c.l.b16 %v582
    %v1151 = vunpack.c.h.b16 %v582
    %v1152 = vunpack.c.l.b16 %v583
    %v1153 = vunpack.c.h.b16 %v583
    %v1154 = vunpack.c.l.b16 %v584
    %v1155 = vunpack.c.h.b16 %v584
    %v1156 = vunpack.c.l.b16 %v585
    %v1157 = vunpack.c.h.b16 %v585
    %v1158 = vunpack.c.l.b16 %v586
    %v1159 = vunpack.c.h.b16 %v586
    %v1160 = vunpack.c.l.b16 %v587
    %v1161 = vunpack.c.h.b16 %v587
    %v1162 = vunpack.c.l.b16 %v588
    %v1163 = vunpack.c.h.b16 %v588
    %v1164 = vunpack.c.l.b16 %v589
    %v1165 = vunpack.c.h.b16 %v589
    %v1166 = vunpack.c.l.b16 %v590
    %v1167 = vunpack.c.h.b16 %v590
    %v1168 = vunpack.c.l.b16 %v591
    %v1169 = vunpack.c.h.b16 %v591
    %v1170 = vunpack.c.l.b16 %v592
    %v1171 = vunpack.c.h.b16 %v592
    %v1172 = vunpack.c.l.b16 %v593
    %v1173 = vunpack.c.h.b16 %v593
    %v1174 = vunpack.c.l.b16 %v594
    %v1175 = vunpack.c.h.b16 %v594
    %v1176 = vunpack.c.l.b16 %v595
    %v1177 = vunpack.c.h.b16 %v595
    %v1178 = vunpack.c.l.b16 %v596
    %v1179 = vunpack.c.h.b16 %v596
    %v1180 = vunpack.c.l.b16 %v597
    %v1181 = vunpack.c.h.b16 %v597
    %v1182 = vunpack.c.l.b16 %v598
    %v1183 = vunpack.c.h.b16 %v598
    %v1184 = vunpack.c.l.b16 %v599
    %v1185 = vunpack.c.h.b16 %v599
    %v1186 = vunpack.c.l.b16 %v600
    %v1187 = vunpack.c.h.b16 %v600
    %v1188 = vunpack.c.l.b16 %v601
    %v1189 = vunpack.c.h.b16 %v601
    %v1190 = vunpack.c.l.b16 %v602
    %v1191 = vunpack.c.h.b16 %v602
    %v1192 = vunpack.c.l.b16 %v603
    %v1193 = vunpack.c.h.b16 %v603
    %v1194 = vunpack.c.l.b16 %v604
    %v1195 = vunpack.c.h.b16 %v604
    %v1196 = vunpack.c.l.b16 %v605
    %v1197 = vunpack.c.h.b16 %v605
    %v1198 = vunpack.c.l.b16 %v606
    %v1199 = vunpack.c.h.b16 %v606
    %v1200 = vunpack.c.l.b16 %v607
    %v1201 = vunpack.c.h.b16 %v607
    %v1202 = vunpack.c.l.b16 %v608
    %v1203 = vunpack.c.h.b16 %v608
    %v1204 = vunpack.c.l.b16 %v609
    %v1205 = vunpack.c.h.b16 %v609
    %v1206 = vunpack.c.l.b16 %v610
    %v1207 = vunpack.c.h.b16 %v610
    %v1208 = vunpack.c.l.b16 %v611
    %v1209 = vunpack.c.h.b16 %v611
    %v1210 = vunpack.c.l.b16 %v612
    %v1211 = vunpack.c.h.b16 %v612
    %v1212 = vunpack.c.l.b16 %v613
    %v1213 = vunpack.c.h.b16 %v613
    %v1214 = vunpack.c.l.b16 %v614
    %v1215 = vunpack.c.h.b16 %v614
    %v1216 = vunpack.c.l.b16 %v615
    %v1217 = vunpack.c.h.b16 %v615
    %v1218 = vunpack.c.l.b16 %v616
    %v1219 = vunpack.c.h.b16 %v616
    %v1220 = vunpack.c.l.b16 %v617
    %v1221 = vunpack.c.h.b16 %v617
    %v1222 = vunpack.c.l.b16 %v618
    %v1223 = vunpack.c.h.b16 %v618
    %v1224 = vunpack.c.l.b16 %v619
    %v1225 = vunpack.c.h.b16 %v619
    %v1226 = vunpack.c.l.b16 %v620
    %v1227 = vunpack.c.h.b16 %v620
    %v1228 = vunpack.c.l.b16 %v621
    %v1229 = vunpack.c.h.b16 %v621
    %v1230 = vunpack.c.l.b16 %v622
    %v1231 = vunpack.c.h.b16 %v622
    %v1232 = vunpack.c.l.b16 %v623
    %v1233 = vunpack.c.h.b16 %v623
    %v1234 = vunpack.c.l.b16 %v624
    %v1235 = vunpack.c.h.b16 %v624
    %v1236 = vunpack.c.l.b16 %v625
    %v1237 = vunpack.c.h.b16 %v625
    %v1238 = vunpack.c.l.b16 %v626
    %v1239 = vunpack.c.h.b16 %v626
    %v1240 = vunpack.c.l.b16 %v627
    %v1241 = vunpack.c.h.b16 %v627
    %v1242 = vunpack.c.l.b16 %v628
    %v1243 = vunpack.c.h.b16 %v628
    %v1244 = vunpack.c.l.b16 %v629
    %v1245 = vunpack.c.h.b16 %v629
    %v1246 = vunpack.c.l.b16 %v630
    %v1247 = vunpack.c.h.b16 %v630
    %v1248 = vunpack.c.l.b16 %v631
    %v1249 = vunpack.c.h.b16 %v631
    %v1250 = vunpack.c.l.b16 %v632
    %v1251 = vunpack.c.h.b16 %v632
    %v1252 = vunpack.c.l.b16 %v633
    %v1253 = vunpack.c.h.b16 %v633
    %v1254 = vunpack.c.l.b16 %v634
    %v1255 = vunpack.c.h.b16 %v634
    %v1256 = vunpack.c.l.b16 %v635
    %v1257 = vunpack.c.h.b16 %v635
    %v1258 = vunpack.c.l.b16 %v636
    %v1259 = vunpack.c.h.b16 %v636
    %v1260 = vunpack.c.l.b16 %v637
    %v1261 = vunpack.c.h.b16 %v637
    %v1262 = vunpack.c.l.b16 %v638
    %v1263 = vunpack.c.h.b16 %v638
    %v1264 = vunpack.c.l.b16 %v639
    %v1265 = vunpack.c.h.b16 %v639
    %v1266 = vunpack.c.l.b16 %v640
    %v1267 = vunpack.c.h.b16 %v640
    %v1268 = vunpack.c.l.b16 %v641
    %v1269 = vunpack.c.h.b16 %v641
    %v1270 = vunpack.c.l.b16 %v642
    %v1271 = vunpack.c.h.b16 %v642
    %v1272 = vunpack.c.l.b16 %v643
    %v1273 = vunpack.c.h.b16 %v643
    %v1274 = vunpack.c.l.b16 %v644
    %v1275 = vunpack.c.h.b16 %v644
    %v1276 = vunpack.c.l.b16 %v645
    %v1277 = vunpack.c.h.b16 %v645
    %v1278 = vunpack.c.l.b16 %v646
    %v1279 = vunpack.c.h.b16 %v646
    %v1280 = vunpack.c.l.b16 %v647
    %v1281 = vunpack.c.h.b16 %v647
    %v1282 = vunpack.c.l.b16 %v648
    %v1283 = vunpack.c.h.b16 %v648
    %v1284 = vunpack.c.l.b16 %v649
    %v1285 = vunpack.c.h.b16 %v649
    %v1286 = vunpack.c.l.b16 %v650
    %v1287 = vunpack.c.h.b16 %v650
    %v1288 = vunpack.c.l.b16 %v651
    %v1289 = vunpack.c.h.b16 %v651
    %v1290 = vunpack.c.l.b16 %v652
    %v1291 = vunpack.c.h.b16 %v652
    %v1292 = vunpack.c.l.b16 %v653
    %v1293 = vunpack.c.h.b16 %v653
    %v1294 = vunpack.c.l.b16 %v654
    %v1295 = vunpack.c.h.b16 %v654
    %v1296 = vunpack.c.l.b16 %v655
    %v1297 = vunpack.c.h.b16 %v655
    %v1298 = vunpack.c.l.b16 %v656
    %v1299 = vunpack.c.h.b16 %v656
    %v1300 = vunpack.c.l.b16 %v657
    %v1301 = vunpack.c.h.b16 %v657
    %v1302 = vunpack.c.l.b16 %v658
    %v1303 = vunpack.c.h.b16 %v658
    %v1304 = vunpack.c.l.b16 %v659
    %v1305 = vunpack.c.h.b16 %v659
    %v1306 = vunpack.c.l.b16 %v660
    %v1307 = vunpack.c.h.b16 %v660
    %v1308 = vunpack.c.l.b16 %v661
    %v1309 = vunpack.c.h.b16 %v661
    %v1310 = vunpack.c.l.b16 %v662
    %v1311 = vunpack.c.h.b16 %v662
    %v1312 = vunpack.c.l.b16 %v663
    %v1313 = vunpack.c.h.b16 %v663
    %v1314 = vunpack.c.l.b16 %v664
    %v1315 = vunpack.c.h.b16 %v664
    %v1316 = vunpack.c.l.b16 %v665
    %v1317 = vunpack.c.h.b16 %v665
    %v1318 = vunpack.c.l.b16 %v666
    %v1319 = vunpack.c.h.b16 %v666
    %v1320 = vunpack.c.l.b16 %v667
    %v1321 = vunpack.c.h.b16 %v667
    %v1322 = vunpack.c.l.b16 %v668
    %v1323 = vunpack.c.h.b16 %v668
    %v1324 = vunpack.c.l.b16 %v669
    %v1325 = vunpack.c.h.b16 %v669
    %v1326 = vunpack.c.l.b16 %v670
    %v1327 = vunpack.c.h.b16 %v670
    %v1328 = vunpack.c.l.b16 %v671
    %v1329 = vunpack.c.h.b16 %v671
    %v1330 = vunpack.c.l.b16 %v672
    %v1331 = vunpack.c.h.b16 %v672
    %v1332 = vunpack.c.l.b16 %v673
    %v1333 = vunpack.c.h.b16 %v673
    %v1334 = vunpack.c.l.b16 %v674
    %v1335 = vunpack.c.h.b16 %v674
    %v1336 = vunpack.c.l.b16 %v675
    %v1337 = vunpack.c.h.b16 %v675
    %v1338 = vunpack.c.l.b16 %v676
    %v1339 = vunpack.c.h.b16 %v676
    %v1340 = vunpack.c.l.b16 %v677
    %v1341 = vunpack.c.h.b16 %v677
    %v1342 = vunpack.c.l.b16 %v678
    %v1343 = vunpack.c.h.b16 %v678
    %v1344 = vunpack.c.l.b16 %v679
    %v1345 = vunpack.c.h.b16 %v679
    %v1346 = vunpack.c.l.b16 %v680
    %v1347 = vunpack.c.h.b16 %v680
    %v1348 = vunpack.c.l.b16 %v681
    %v1349 = vunpack.c.h.b16 %v681
    %v1350 = vunpack.c.l.b16 %v682
    %v1351 = vunpack.c.h.b16 %v682
    %v1352 = vunpack.c.l.b16 %v683
    %v1353 = vunpack.c.h.b16 %v683
    %v1354 = vunpack.c.l.b16 %v684
    %v1355 = vunpack.c.h.b16 %v684
    %v1356 = vunpack.c.l.b16 %v685
    %v1357 = vunpack.c.h.b16 %v685
    %v1358 = vunpack.c.l.b16 %v686
    %v1359 = vunpack.c.h.b16 %v686
    %v1360 = vunpack.c.l.b16 %v687
    %v1361 = vunpack.c.h.b16 %v687
    %v1362 = vunpack.c.l.b16 %v688
    %v1363 = vunpack.c.h.b16 %v688
    %v1364 = vunpack.c.l.b16 %v689
    %v1365 = vunpack.c.h.b16 %v689
    %v1366 = vunpack.c.l.b16 %v690
    %v1367 = vunpack.c.h.b16 %v690
    %v1368 = vunpack.c.l.b16 %v691
    %v1369 = vunpack.c.h.b16 %v691
    %v1370 = vunpack.c.l.b16 %v692
    %v1371 = vunpack.c.h.b16 %v692
    %v1372 = vunpack.c.l.b16 %v693
    %v1373 = vunpack.c.h.b16 %v693
    %v1374 = vunpack.c.l.b16 %v694
    %v1375 = vunpack.c.h.b16 %v694
    %v1376 = vunpack.c.l.b16 %v695
    %v1377 = vunpack.c.h.b16 %v695
    %v1378 = vunpack.c.l.b16 %v696
    %v1379 = vunpack.c.h.b16 %v696
    %v1380 = vunpack.c.l.b16 %v697
    %v1381 = vunpack.c.h.b16 %v697
    %v1382 = vunpack.c.l.b16 %v698
    %v1383 = vunpack.c.h.b16 %v698
    %v1384 = vunpack.c.l.b16 %v699
    %v1385 = vunpack.c.h.b16 %v699
    %v1386 = vunpack.c.l.b16 %v700
    %v1387 = vunpack.c.h.b16 %v700
    %v1388 = vunpack.c.l.b16 %v701
    %v1389 = vunpack.c.h.b16 %v701
    %v1390 = vunpack.c.l.b16 %v702
    %v1391 = vunpack.c.h.b16 %v702
    %v1392 = vunpack.c.l.b16 %v703
    %v1393 = vunpack.c.h.b16 %v703
    %v1394 = vunpack.c.l.b16 %v704
    %v1395 = vunpack.c.h.b16 %v704
    %v1396 = vunpack.c.l.b16 %v705
    %v1397 = vunpack.c.h.b16 %v705
    %v1398 = vunpack.c.l.b16 %v706
    %v1399 = vunpack.c.h.b16 %v706
    %v1400 = vunpack.c.l.b16 %v707
    %v1401 = vunpack.c.h.b16 %v707
    %v1402 = vunpack.c.l.b16 %v708
    %v1403 = vunpack.c.h.b16 %v708
    %v1404 = vunpack.c.l.b16 %v709
    %v1405 = vunpack.c.h.b16 %v709
    %v1406 = vunpack.c.l.b16 %v710
    %v1407 = vunpack.c.h.b16 %v710
    %v1408 = vunpack.c.l.b16 %v711
    %v1409 = vunpack.c.h.b16 %v711
    %v1410 = vunpack.c.l.b16 %v712
    %v1411 = vunpack.c.h.b16 %v712
    %v1412 = vunpack.c.l.b16 %v713
    %v1413 = vunpack.c.h.b16 %v713
    %v1414 = vunpack.c.l.b16 %v714
    %v1415 = vunpack.c.h.b16 %v714
    %v1416 = vunpack.c.l.b16 %v715
    %v1417 = vunpack.c.h.b16 %v715
    %v1418 = vunpack.c.l.b16 %v716
    %v1419 = vunpack.c.h.b16 %v716
    %v1420 = vunpack.c.l.b16 %v717
    %v1421 = vunpack.c.h.b16 %v717
    %v1422 = vunpack.c.l.b16 %v718
    %v1423 = vunpack.c.h.b16 %v718
    %v1424 = vunpack.c.l.b16 %v719
    %v1425 = vunpack.c.h.b16 %v719
    %v1426 = vunpack.c.l.b16 %v720
    %v1427 = vunpack.c.h.b16 %v720
    %v1428 = vunpack.c.l.b16 %v721
    %v1429 = vunpack.c.h.b16 %v721
    %v1430 = vunpack.c.l.b16 %v722
    %v1431 = vunpack.c.h.b16 %v722
    %v1432 = vunpack.c.l.b16 %v723
    %v1433 = vunpack.c.h.b16 %v723
    %v1434 = vunpack.c.l.b16 %v724
    %v1435 = vunpack.c.h.b16 %v724
    %v1436 = vunpack.c.l.b16 %v725
    %v1437 = vunpack.c.h.b16 %v725
    %v1438 = vunpack.c.l.b16 %v726
    %v1439 = vunpack.c.h.b16 %v726
    %v1440 = vunpack.c.l.b16 %v727
    %v1441 = vunpack.c.h.b16 %v727
    %v1442 = vunpack.c.l.b16 %v728
    %v1443 = vunpack.c.h.b16 %v728
    %v1444 = vunpack.c.l.b16 %v729
    %v1445 = vunpack.c.h.b16 %v729
    %v1446 = vunpack.c.l.b16 %v730
    %v1447 = vunpack.c.h.b16 %v730
    %v1448 = vunpack.c.l.b16 %v731
    %v1449 = vunpack.c.h.b16 %v731
    %v1450 = vunpack.c.l.b16 %v732
    %v1451 = vunpack.c.h.b16 %v732
    %v1452 = vunpack.c.l.b16 %v733
    %v1453 = vunpack.c.h.b16 %v733
    %v1454 = vunpack.c.l.b16 %v734
    %v1455 = vunpack.c.h.b16 %v734
    %v1456 = vunpack.c.l.b16 %v735
    %v1457 = vunpack.c.h.b16 %v735
    %v1458 = vunpack.c.l.b16 %v736
    %v1459 = vunpack.c.h.b16 %v736
    %v1460 = vunpack.c.l.b16 %v737
    %v1461 = vunpack.c.h.b16 %v737
    %v1462 = vunpack.c.l.b16 %v738
    %v1463 = vunpack.c.h.b16 %v738
    %v1464 = vunpack.c.l.b16 %v739
    %v1465 = vunpack.c.h.b16 %v739
    %v1466 = vunpack.c.l.b16 %v740
    %v1467 = vunpack.c.h.b16 %v740
    %v1468 = vunpack.c.l.b16 %v741
    %v1469 = vunpack.c.h.b16 %v741
    %v1470 = vunpack.c.l.b16 %v742
    %v1471 = vunpack.c.h.b16 %v742
    %v1472 = vunpack.c.l.b16 %v743
    %v1473 = vunpack.c.h.b16 %v743
    %v1474 = vunpack.c.l.b16 %v744
    %v1475 = vunpack.c.h.b16 %v744
    %v1476 = vunpack.c.l.b16 %v745
    %v1477 = vunpack.c.h.b16 %v745
    %v1478 = vunpack.c.l.b16 %v746
    %v1479 = vunpack.c.h.b16 %v746
    %v1480 = vunpack.c.l.b16 %v747
    %v1481 = vunpack.c.h.b16 %v747
    %v1482 = vunpack.c.l.b16 %v748
    %v1483 = vunpack.c.h.b16 %v748
    %v1484 = vunpack.c.l.b16 %v749
    %v1485 = vunpack.c.h.b16 %v749
    %v1486 = vunpack.c.l.b16 %v750
    %v1487 = vunpack.c.h.b16 %v750
    %v1488 = vunpack.c.l.b16 %v751
    %v1489 = vunpack.c.h.b16 %v751
    %v1490 = vunpack.c.l.b16 %v752
    %v1491 = vunpack.c.h.b16 %v752
    %v1492 = vunpack.c.l.b16 %v753
    %v1493 = vunpack.c.h.b16 %v753
    %v1494 = vunpack.c.l.b16 %v754
    %v1495 = vunpack.c.h.b16 %v754
    %v1496 = vunpack.c.l.b16 %v755
    %v1497 = vunpack.c.h.b16 %v755
    %v1498 = vunpack.c.l.b16 %v756
    %v1499 = vunpack.c.h.b16 %v756
    %v1500 = vunpack.c.l.b16 %v757
    %v1501 = vunpack.c.h.b16 %v757
    %v1502 = vunpack.c.l.b16 %v758
    %v1503 = vunpack.c.h.b16 %v758
    %v1504 = vunpack.c.l.b16 %v759
    %v1505 = vunpack.c.h.b16 %v759
    %v1506 = vunpack.c.l.b16 %v760
    %v1507 = vunpack.c.h.b16 %v760
    %v1508 = vunpack.c.l.b16 %v761
    %v1509 = vunpack.c.h.b16 %v761
    %v1510 = vunpack.c.l.b16 %v762
    %v1511 = vunpack.c.h.b16 %v762
    %v1512 = vunpack.c.l.b16 %v763
    %v1513 = vunpack.c.h.b16 %v763
    %v1514 = vunpack.c.l.b16 %v764
    %v1515 = vunpack.c.h.b16 %v764
    %v1516 = vunpack.c.l.b16 %v765
    %v1517 = vunpack.c.h.b16 %v765
    %v1518 = vunpack.c.l.b16 %v766
    %v1519 = vunpack.c.h.b16 %v766
    %v1520 = vunpack.c.l.b16 %v767
    %v1521 = vunpack.c.h.b16 %v767
    %v1522 = vunpack.c.l.b16 %v768
    %v1523 = vunpack.c.h.b16 %v768
    %v1524 = vunpack.c.l.b16 %v769
    %v1525 = vunpack.c.h.b16 %v769
    %v1526 = vunpack.c.l.b16 %v770
    %v1527 = vunpack.c.h.b16 %v770
    %v1528 = vunpack.c.l.b16 %v771
    %v1529 = vunpack.c.h.b16 %v771
    %v1530 = vunpack.c.l.b16 %v772
    %v1531 = vunpack.c.h.b16 %v772
    %v1532 = vunpack.c.l.b16 %v773
    %v1533 = vunpack.c.h.b16 %v773
    %v1534 = vunpack.c.l.b16 %v774
    %v1535 = vunpack.c.h.b16 %v774
    %v1536 = vunpack.c.l.b16 %v775
    %v1537 = vunpack.c.h.b16 %v775
    %v1538 = vunpack.c.l.b16 %v776
    %v1539 = vunpack.c.h.b16 %v776
    %v1540 = vunpack.c.l.b16 %v777
    %v1541 = vunpack.c.h.b16 %v777
    %v1542 = vunpack.c.l.b16 %v778
    %v1543 = vunpack.c.h.b16 %v778
    %v1544 = vunpack.c.l.b16 %v779
    %v1545 = vunpack.c.h.b16 %v779
    %v1546 = vunpack.c.l.b16 %v780
    %v1547 = vunpack.c.h.b16 %v780
    %v1548 = vunpack.c.l.b16 %v781
    %v1549 = vunpack.c.h.b16 %v781
    %v1550 = vpack.c.b16 %v1042, %v1038
    %v1551 = vpack.c.b16 %v1043, %v1039
    %v1552 = vpack.c.b16 %v1044, %v1040
    %v1553 = vpack.c.b16 %v1045, %v1041
    %v1554 = vpack.c.b16 %v1050, %v1046
    %v1555 = vpack.c.b16 %v1051, %v1047
    %v1556 = vpack.c.b16 %v1052, %v1048
    %v1557 = vpack.c.b16 %v1053, %v1049
    %v1558 = vpack.c.b16 %v1058, %v1054
    %v1559 = vpack.c.b16 %v1059, %v1055
    %v1560 = vpack.c.b16 %v1060, %v1056
    %v1561 = vpack.c.b16 %v1061, %v1057
    %v1562 = vpack.c.b16 %v1066, %v1062
    %v1563 = vpack.c.b16 %v1067, %v1063
    %v1564 = vpack.c.b16 %v1068, %v1064
    %v1565 = vpack.c.b16 %v1069, %v1065
    %v1566 = vpack.c.b16 %v1074, %v1070
    %v1567 = vpack.c.b16 %v1075, %v1071
    %v1568 = vpack.c.b16 %v1076, %v1072
    %v1569 = vpack.c.b16 %v1077, %v1073
    %v1570 = vpack.c.b16 %v1082, %v1078
    %v1571 = vpack.c.b16 %v1083, %v1079
    %v1572 = vpack.c.b16 %v1084, %v1080
    %v1573 = vpack.c.b16 %v1085, %v1081
    %v1574 = vpack.c.b16 %v1090, %v1086
    %v1575 = vpack.c.b16 %v1091, %v1087
    %v1576 = vpack.c.b16 %v1092, %v1088
    %v1577 = vpack.c.b16 %v1093, %v1089
    %v1578 = vpack.c.b16 %v1098, %v1094
    %v1579 = vpack.c.b16 %v1099, %v1095
    %v1580 = vpack.c.b16 %v1100, %v1096
    %v1581 = vpack.c.b16 %v1101, %v1097
    %v1582 = vpack.c.b16 %v1106, %v1102
    %v1583 = vpack.c.b16 %v1107, %v1103
    %v1584 = vpack.c.b16 %v1108, %v1104
    %v1585 = vpack.c.b16 %v1109, %v1105
    %v1586 = vpack.c.b16 %v1114, %v1110
    %v1587 = vpack.c.b16 %v1115, %v1111
    %v1588 = vpack.c.b16 %v1116, %v1112
    %v1589 = vpack.c.b16 %v1117, %v1113
    %v1590 = vpack.c.b16 %v1122, %v1118
    %v1591 = vpack.c.b16 %v1123, %v1119
    %v1592 = vpack.c.b16 %v1124, %v1120
    %v1593 = vpack.c.b16 %v1125, %v1121
    %v1594 = vpack.c.b16 %v1130, %v1126
    %v1595 = vpack.c.b16 %v1131, %v1127
    %v1596 = vpack.c.b16 %v1132, %v1128
    %v1597 = vpack.c.b16 %v1133, %v1129
    %v1598 = vpack.c.b16 %v1138, %v1134
    %v1599 = vpack.c.b16 %v1139, %v1135
    %v1600 = vpack.c.b16 %v1140, %v1136
    %v1601 = vpack.c.b16 %v1141, %v1137
    %v1602 = vpack.c.b16 %v1146, %v1142
    %v1603 = vpack.c.b16 %v1147, %v1143
    %v1604 = vpack.c.b16 %v1148, %v1144
    %v1605 = vpack.c.b16 %v1149, %v1145
    %v1606 = vpack.c.b16 %v1154, %v1150
    %v1607 = vpack.c.b16 %v1155, %v1151
    %v1608 = vpack.c.b16 %v1156, %v1152
    %v1609 = vpack.c.b16 %v1157, %v1153
    %v1610 = vpack.c.b16 %v1162, %v1158
    %v1611 = vpack.c.b16 %v1163, %v1159
    %v1612 = vpack.c.b16 %v1164, %v1160
    %v1613 = vpack.c.b16 %v1165, %v1161
    %v1614 = vpack.c.b16 %v1170, %v1166
    %v1615 = vpack.c.b16 %v1171, %v1167
    %v1616 = vpack.c.b16 %v1172, %v1168
    %v1617 = vpack.c.b16 %v1173, %v1169
    %v1618 = vpack.c.b16 %v1178, %v1174
    %v1619 = vpack.c.b16 %v1179, %v1175
    %v1620 = vpack.c.b16 %v1180, %v1176
    %v1621 = vpack.c.b16 %v1181, %v1177
    %v1622 = vpack.c.b16 %v1186, %v1182
    %v1623 = vpack.c.b16 %v1187, %v1183
    %v1624 = vpack.c.b16 %v1188, %v1184
    %v1625 = vpack.c.b16 %v1189, %v1185
    %v1626 = vpack.c.b16 %v1194, %v1190
    %v1627 = vpack.c.b16 %v1195, %v1191
    %v1628 = vpack.c.b16 %v1196, %v1192
    %v1629 = vpack.c.b16 %v1197, %v1193
    %v1630 = vpack.c.b16 %v1202, %v1198
    %v1631 = vpack.c.b16 %v1203, %v1199
    %v1632 = vpack.c.b16 %v1204, %v1200
    %v1633 = vpack.c.b16 %v1205, %v1201
    %v1634 = vpack.c.b16 %v1210, %v1206
    %v1635 = vpack.c.b16 %v1211, %v1207
    %v1636 = vpack.c.b16 %v1212, %v1208
    %v1637 = vpack.c.b16 %v1213, %v1209
    %v1638 = vpack.c.b16 %v1218, %v1214
    %v1639 = vpack.c.b16 %v1219, %v1215
    %v1640 = vpack.c.b16 %v1220, %v1216
    %v1641 = vpack.c.b16 %v1221, %v1217
    %v1642 = vpack.c.b16 %v1226, %v1222
    %v1643 = vpack.c.b16 %v1227, %v1223
    %v1644 = vpack.c.b16 %v1228, %v1224
    %v1645 = vpack.c.b16 %v1229, %v1225
    %v1646 = vpack.c.b16 %v1234, %v1230
    %v1647 = vpack.c.b16 %v1235, %v1231
    %v1648 = vpack.c.b16 %v1236, %v1232
    %v1649 = vpack.c.b16 %v1237, %v1233
    %v1650 = vpack.c.b16 %v1242, %v1238
    %v1651 = vpack.c.b16 %v1243, %v1239
    %v1652 = vpack.c.b16 %v1244, %v1240
    %v1653 = vpack.c.b16 %v1245, %v1241
    %v1654 = vpack.c.b16 %v1250, %v1246
    %v1655 = vpack.c.b16 %v1251, %v1247
    %v1656 = vpack.c.b16 %v1252, %v1248
    %v1657 = vpack.c.b16 %v1253, %v1249
    %v1658 = vpack.c.b16 %v1258, %v1254
    %v1659 = vpack.c.b16 %v1259, %v1255
    %v1660 = vpack.c.b16 %v1260, %v1256
    %v1661 = vpack.c.b16 %v1261, %v1257
    %v1662 = vpack.c.b16 %v1266, %v1262
    %v1663 = vpack.c.b16 %v1267, %v1263
    %v1664 = vpack.c.b16 %v1268, %v1264
    %v1665 = vpack.c.b16 %v1269, %v1265
    %v1666 = vpack.c.b16 %v1274, %v1270
    %v1667 = vpack.c.b16 %v1275, %v1271
    %v1668 = vpack.c.b16 %v1276, %v1272
    %v1669 = vpack.c.b16 %v1277, %v1273
    %v1670 = vpack.c.b16 %v1282, %v1278
    %v1671 = vpack.c.b16 %v1283, %v1279
    %v1672 = vpack.c.b16 %v1284, %v1280
    %v1673 = vpack.c.b16 %v1285, %v1281
    %v1674 = vpack.c.b16 %v1290, %v1286
    %v1675 = vpack.c.b16 %v1291, %v1287
    %v1676 = vpack.c.b16 %v1292, %v1288
    %v1677 = vpack.c.b16 %v1293, %v1289
    %v1678 = vpack.c.b16 %v1298, %v1294
    %v1679 = vpack.c.b16 %v1299, %v1295
    %v1680 = vpack.c.b16 %v1300, %v1296
    %v1681 = vpack.c.b16 %v1301, %v1297
    %v1682 = vpack.c.b16 %v1306, %v1302
    %v1683 = vpack.c.b16 %v1307, %v1303
    %v1684 = vpack.c.b16 %v1308, %v1304
    %v1685 = vpack.c.b16 %v1309, %v1305
    %v1686 = vpack.c.b16 %v1314, %v1310
    %v1687 = vpack.c.b16 %v1315, %v1311
    %v1688 = vpack.c.b16 %v1316, %v1312
    %v1689 = vpack.c.b16 %v1317, %v1313
    %v1690 = vpack.c.b16 %v1322, %v1318
    %v1691 = vpack.c.b16 %v1323, %v1319
    %v1692 = vpack.c.b16 %v1324, %v1320
    %v1693 = vpack.c.b16 %v1325, %v1321
    %v1694 = vpack.c.b16 %v1330, %v1326
    %v1695 = vpack.c.b16 %v1331, %v1327
    %v1696 = vpack.c.b16 %v1332, %v1328
    %v1697 = vpack.c.b16 %v1333, %v1329
    %v1698 = vpack.c.b16 %v1338, %v1334
    %v1699 = vpack.c.b16 %v1339, %v1335
    %v1700 = vpack.c.b16 %v1340, %v1336
    %v1701 = vpack.c.b16 %v1341, %v1337
    %v1702 = vpack.c.b16 %v1346, %v1342
    %v1703 = vpack.c.b16 %v1347, %v1343
    %v1704 = vpack.c.b16 %v1348, %v1344
    %v1705 = vpack.c.b16 %v1349, %v1345
    %v1706 = vpack.c.b16 %v1354, %v1350
    %v1707 = vpack.c.b16 %v1355, %v1351
    %v1708 = vpack.c.b16 %v1356, %v1352
    %v1709 = vpack.c.b16 %v1357, %v1353
    %v1710 = vpack.c.b16 %v1362, %v1358
    %v1711 = vpack.c.b16 %v1363, %v1359
    %v1712 = vpack.c.b16 %v1364, %v1360
    %v1713 = vpack.c.b16 %v1365, %v1361
    %v1714 = vpack.c.b16 %v1370, %v1366
    %v1715 = vpack.c.b16 %v1371, %v1367
    %v1716 = vpack.c.b16 %v1372, %v1368
    %v1717 = vpack.c.b16 %v1373, %v1369
    %v1718 = vpack.c.b16 %v1378, %v1374
    %v1719 = vpack.c.b16 %v1379, %v1375
    %v1720 = vpack.c.b16 %v1380, %v1376
    %v1721 = vpack.c.b16 %v1381, %v1377
    %v1722 = vpack.c.b16 %v1386, %v1382
    %v1723 = vpack.c.b16 %v1387, %v1383
    %v1724 = vpack.c.b16 %v1388, %v1384
    %v1725 = vpack.c.b16 %v1389, %v1385
    %v1726 = vpack.c.b16 %v1394, %v1390
    %v1727 = vpack.c.b16 %v1395, %v1391
    %v1728 = vpack.c.b16 %v1396, %v1392
    %v1729 = vpack.c.b16 %v1397, %v1393
    %v1730 = vpack.c.b16 %v1402, %v1398
    %v1731 = vpack.c.b16 %v1403, %v1399
    %v1732 = vpack.c.b16 %v1404, %v1400
    %v1733 = vpack.c.b16 %v1405, %v1401
    %v1734 = vpack.c.b16 %v1410, %v1406
    %v1735 = vpack.c.b16 %v1411, %v1407
    %v1736 = vpack.c.b16 %v1412, %v1408
    %v1737 = vpack.c.b16 %v1413, %v1409
    %v1738 = vpack.c.b16 %v1418, %v1414
    %v1739 = vpack.c.b16 %v1419, %v1415
    %v1740 = vpack.c.b16 %v1420, %v1416
    %v1741 = vpack.c.b16 %v1421, %v1417
    %v1742 = vpack.c.b16 %v1426, %v1422
    %v1743 = vpack.c.b16 %v1427, %v1423
    %v1744 = vpack.c.b16 %v1428, %v1424
    %v1745 = vpack.c.b16 %v1429, %v1425
    %v1746 = vpack.c.b16 %v1434, %v1430
    %v1747 = vpack.c.b16 %v1435, %v1431
    %v1748 = vpack.c.b16 %v1436, %v1432
    %v1749 = vpack.c.b16 %v1437, %v1433
    %v1750 = vpack.c.b16 %v1442, %v1438
    %v1751 = vpack.c.b16 %v1443, %v1439
    %v1752 = vpack.c.b16 %v1444, %v1440
    %v1753 = vpack.c.b16 %v1445, %v1441
    %v1754 = vpack.c.b16 %v1450, %v1446
    %v1755 = vpack.c.b16 %v1451, %v1447
    %v1756 = vpack.c.b16 %v1452, %v1448
    %v1757 = vpack.c.b16 %v1453, %v1449
    %v1758 = vpack.c.b16 %v1458, %v1454
    %v1759 = vpack.c.b16 %v1459, %v1455
    %v1760 = vpack.c.b16 %v1460, %v1456
    %v1761 = vpack.c.b16 %v1461, %v1457
    %v1762 = vpack.c.b16 %v1466, %v1462
    %v1763 = vpack.c.b16 %v1467, %v1463
    %v1764 = vpack.c.b16 %v1468, %v1464
    %v1765 = vpack.c.b16 %v1469, %v1465
    %v1766 = vpack.c.b16 %v1474, %v1470
    %v1767 = vpack.c.b16 %v1475, %v1471
    %v1768 = vpack.c.b16 %v1476, %v1472
    %v1769 = vpack.c.b16 %v1477, %v1473
    %v1770 = vpack.c.b16 %v1482, %v1478
    %v1771 = vpack.c.b16 %v1483, %v1479
    %v1772 = vpack.c.b16 %v1484, %v1480
    %v1773 = vpack.c.b16 %v1485, %v1481
    %v1774 = vpack.c.b16 %v1490, %v1486
    %v1775 = vpack.c.b16 %v1491, %v1487
    %v1776 = vpack.c.b16 %v1492, %v1488
    %v1777 = vpack.c.b16 %v1493, %v1489
    %v1778 = vpack.c.b16 %v1498, %v1494
    %v1779 = vpack.c.b16 %v1499, %v1495
    %v1780 = vpack.c.b16 %v1500, %v1496
    %v1781 = vpack.c.b16 %v1501, %v1497
    %v1782 = vpack.c.b16 %v1506, %v1502
    %v1783 = vpack.c.b16 %v1507, %v1503
    %v1784 = vpack.c.b16 %v1508, %v1504
    %v1785 = vpack.c.b16 %v1509, %v1505
    %v1786 = vpack.c.b16 %v1514, %v1510
    %v1787 = vpack.c.b16 %v1515, %v1511
    %v1788 = vpack.c.b16 %v1516, %v1512
    %v1789 = vpack.c.b16 %v1517, %v1513
    %v1790 = vpack.c.b16 %v1522, %v1518
    %v1791 = vpack.c.b16 %v1523, %v1519
    %v1792 = vpack.c.b16 %v1524, %v1520
    %v1793 = vpack.c.b16 %v1525, %v1521
    %v1794 = vpack.c.b16 %v1530, %v1526
    %v1795 = vpack.c.b16 %v1531, %v1527
    %v1796 = vpack.c.b16 %v1532, %v1528
    %v1797 = vpack.c.b16 %v1533, %v1529
    %v1798 = vpack.c.b16 %v1538, %v1534
    %v1799 = vpack.c.b16 %v1539, %v1535
    %v1800 = vpack.c.b16 %v1540, %v1536
    %v1801 = vpack.c.b16 %v1541, %v1537
    %v1802 = vpack.c.b16 %v1546, %v1542
    %v1803 = vpack.c.b16 %v1547, %v1543
    %v1804 = vpack.c.b16 %v1548, %v1544
    %v1805 = vpack.c.b16 %v1549, %v1545
    %2062 = vmatprep.subr.bf16.mxu0 %v1551
    %2063 = vmatpush1.bf16.msra.mxu0 %v1550
    %2064 = vmatprep.subr.bf16.mxu0 %v1555
    %2065 = vmatpush1.bf16.msra.mxu0 %v1554
    %2066 = vmatprep.subr.bf16.mxu0 %v1559
    %2067 = vmatpush1.bf16.msra.mxu0 %v1558
    %2068 = vmatprep.subr.bf16.mxu0 %v1563
    %2069 = vmatpush1.bf16.msra.mxu0 %v1562
    %2070 = vmatprep.subr.bf16.mxu0 %v1567
    %2071 = vmatpush1.bf16.msra.mxu0 %v1566
    %2072 = vmatprep.subr.bf16.mxu0 %v1571
    %2073 = vmatpush1.bf16.msra.mxu0 %v1570
    %2074 = vmatprep.subr.bf16.mxu0 %v1575
    %2075 = vmatpush1.bf16.msra.mxu0 %v1574
    %2076 = vmatprep.subr.bf16.mxu0 %v1579
    %2077 = vmatpush1.bf16.msra.mxu0 %v1578
    %2078 = vmatprep.subr.bf16.mxu0 %v1583
    %2079 = vmatpush1.bf16.msra.mxu0 %v1582
    %2080 = vmatprep.subr.bf16.mxu0 %v1587
    %2081 = vmatpush1.bf16.msra.mxu0 %v1586
    %2082 = vmatprep.subr.bf16.mxu0 %v1591
    %2083 = vmatpush1.bf16.msra.mxu0 %v1590
    %2084 = vmatprep.subr.bf16.mxu0 %v1595
    %2085 = vmatpush1.bf16.msra.mxu0 %v1594
    %2086 = vmatprep.subr.bf16.mxu0 %v1599
    %2087 = vmatpush1.bf16.msra.mxu0 %v1598
    %2088 = vmatprep.subr.bf16.mxu0 %v1603
    %2089 = vmatpush1.bf16.msra.mxu0 %v1602
    %2090 = vmatprep.subr.bf16.mxu0 %v1607
    %2091 = vmatpush1.bf16.msra.mxu0 %v1606
    %2092 = vmatprep.subr.bf16.mxu0 %v1611
    %2093 = vmatpush1.bf16.msra.mxu0 %v1610
    %2094 = vmatprep.mubr.bf16.mxu0 %v519
    %2095 = vmatmul.mubr.bf16.gmra.mrb[0].mxu0 %v518
    %v2096 = vpop.f32.mrb[0].mxu0
    %v2097 = vadd.f32 0.0, %v2096
    %v2098 = vpop.f32.mrb[0].mxu0
    %v2099 = vadd.f32 0.0, %v2098
    %v2100 = vpop.f32.mrb[0].mxu0
    %v2101 = vpop.f32.mrb[0].mxu0
    %2102 = vdwg.mxu0
    %2103 = vmatprep.subr.bf16.mxu0 %v1615
    %2104 = vmatpush1.bf16.msra.mxu0 %v1614
    %2105 = vmatprep.subr.bf16.mxu0 %v1619
    %2106 = vmatpush1.bf16.msra.mxu0 %v1618
    %2107 = vmatprep.subr.bf16.mxu0 %v1623
    %2108 = vmatpush1.bf16.msra.mxu0 %v1622
    %2109 = vmatprep.subr.bf16.mxu0 %v1627
    %2110 = vmatpush1.bf16.msra.mxu0 %v1626
    %2111 = vmatprep.subr.bf16.mxu0 %v1631
    %2112 = vmatpush1.bf16.msra.mxu0 %v1630
    %2113 = vmatprep.subr.bf16.mxu0 %v1635
    %2114 = vmatpush1.bf16.msra.mxu0 %v1634
    %2115 = vmatprep.subr.bf16.mxu0 %v1639
    %2116 = vmatpush1.bf16.msra.mxu0 %v1638
    %2117 = vmatprep.subr.bf16.mxu0 %v1643
    %2118 = vmatpush1.bf16.msra.mxu0 %v1642
    %2119 = vmatprep.subr.bf16.mxu0 %v1647
    %2120 = vmatpush1.bf16.msra.mxu0 %v1646
    %2121 = vmatprep.subr.bf16.mxu0 %v1651
    %2122 = vmatpush1.bf16.msra.mxu0 %v1650
    %2123 = vmatprep.subr.bf16.mxu0 %v1655
    %2124 = vmatpush1.bf16.msra.mxu0 %v1654
    %2125 = vmatprep.subr.bf16.mxu0 %v1659
    %2126 = vmatpush1.bf16.msra.mxu0 %v1658
    %2127 = vmatprep.subr.bf16.mxu0 %v1663
    %2128 = vmatpush1.bf16.msra.mxu0 %v1662
    %2129 = vmatprep.subr.bf16.mxu0 %v1667
    %2130 = vmatpush1.bf16.msra.mxu0 %v1666
    %2131 = vmatprep.subr.bf16.mxu0 %v1671
    %2132 = vmatpush1.bf16.msra.mxu0 %v1670
    %2133 = vmatprep.subr.bf16.mxu0 %v1675
    %2134 = vmatpush1.bf16.msra.mxu0 %v1674
    %2135 = vmatprep.mubr.bf16.mxu0 %v521
    %2136 = vmatmul.mubr.bf16.gmra.mrb[0].mxu0 %v520
    %v2137 = vpop.f32.mrb[0].mxu0
    %v2138 = vadd.f32 %v2097, %v2137
    %v2139 = vpop.f32.mrb[0].mxu0
    %v2140 = vadd.f32 %v2099, %v2139
    %v2141 = vpop.f32.mrb[0].mxu0
    %v2142 = vpop.f32.mrb[0].mxu0
    %2143 = vdwg.mxu0
    %2144 = vmatprep.subr.bf16.mxu0 %v1679
    %2145 = vmatpush1.bf16.msra.mxu0 %v1678
    %2146 = vmatprep.subr.bf16.mxu0 %v1683
    %2147 = vmatpush1.bf16.msra.mxu0 %v1682
    %2148 = vmatprep.subr.bf16.mxu0 %v1687
    %2149 = vmatpush1.bf16.msra.mxu0 %v1686
    %2150 = vmatprep.subr.bf16.mxu0 %v1691
    %2151 = vmatpush1.bf16.msra.mxu0 %v1690
    %2152 = vmatprep.subr.bf16.mxu0 %v1695
    %2153 = vmatpush1.bf16.msra.mxu0 %v1694
    %2154 = vmatprep.subr.bf16.mxu0 %v1699
    %2155 = vmatpush1.bf16.msra.mxu0 %v1698
    %2156 = vmatprep.subr.bf16.mxu0 %v1703
    %2157 = vmatpush1.bf16.msra.mxu0 %v1702
    %2158 = vmatprep.subr.bf16.mxu0 %v1707
    %2159 = vmatpush1.bf16.msra.mxu0 %v1706
    %2160 = vmatprep.subr.bf16.mxu0 %v1711
    %2161 = vmatpush1.bf16.msra.mxu0 %v1710
    %2162 = vmatprep.subr.bf16.mxu0 %v1715
    %2163 = vmatpush1.bf16.msra.mxu0 %v1714
    %2164 = vmatprep.subr.bf16.mxu0 %v1719
    %2165 = vmatpush1.bf16.msra.mxu0 %v1718
    %2166 = vmatprep.subr.bf16.mxu0 %v1723
    %2167 = vmatpush1.bf16.msra.mxu0 %v1722
    %2168 = vmatprep.subr.bf16.mxu0 %v1727
    %2169 = vmatpush1.bf16.msra.mxu0 %v1726
    %2170 = vmatprep.subr.bf16.mxu0 %v1731
    %2171 = vmatpush1.bf16.msra.mxu0 %v1730
    %2172 = vmatprep.subr.bf16.mxu0 %v1735
    %2173 = vmatpush1.bf16.msra.mxu0 %v1734
    %2174 = vmatprep.subr.bf16.mxu0 %v1739
    %2175 = vmatpush1.bf16.msra.mxu0 %v1738
    %2176 = vmatprep.mubr.bf16.mxu0 %v523
    %2177 = vmatmul.mubr.bf16.gmra.mrb[0].mxu0 %v522
    %v2178 = vpop.f32.mrb[0].mxu0
    %v2179 = vadd.f32 %v2138, %v2178
    %v2180 = vpop.f32.mrb[0].mxu0
    %v2181 = vadd.f32 %v2140, %v2180
    %v2182 = vpop.f32.mrb[0].mxu0
    %v2183 = vpop.f32.mrb[0].mxu0
    %2184 = vdwg.mxu0
    %2185 = vmatprep.subr.bf16.mxu0 %v1743
    %2186 = vmatpush1.bf16.msra.mxu0 %v1742
    %2187 = vmatprep.subr.bf16.mxu0 %v1747
    %2188 = vmatpush1.bf16.msra.mxu0 %v1746
    %2189 = vmatprep.subr.bf16.mxu0 %v1751
    %2190 = vmatpush1.bf16.msra.mxu0 %v1750
    %2191 = vmatprep.subr.bf16.mxu0 %v1755
    %2192 = vmatpush1.bf16.msra.mxu0 %v1754
    %2193 = vmatprep.subr.bf16.mxu0 %v1759
    %2194 = vmatpush1.bf16.msra.mxu0 %v1758
    %2195 = vmatprep.subr.bf16.mxu0 %v1763
    %2196 = vmatpush1.bf16.msra.mxu0 %v1762
    %2197 = vmatprep.subr.bf16.mxu0 %v1767
    %2198 = vmatpush1.bf16.msra.mxu0 %v1766
    %2199 = vmatprep.subr.bf16.mxu0 %v1771
    %2200 = vmatpush1.bf16.msra.mxu0 %v1770
    %2201 = vmatprep.subr.bf16.mxu0 %v1775
    %2202 = vmatpush1.bf16.msra.mxu0 %v1774
    %2203 = vmatprep.subr.bf16.mxu0 %v1779
    %2204 = vmatpush1.bf16.msra.mxu0 %v1778
    %2205 = vmatprep.subr.bf16.mxu0 %v1783
    %2206 = vmatpush1.bf16.msra.mxu0 %v1782
    %2207 = vmatprep.subr.bf16.mxu0 %v1787
    %2208 = vmatpush1.bf16.msra.mxu0 %v1786
    %2209 = vmatprep.subr.bf16.mxu0 %v1791
    %2210 = vmatpush1.bf16.msra.mxu0 %v1790
    %2211 = vmatprep.subr.bf16.mxu0 %v1795
    %2212 = vmatpush1.bf16.msra.mxu0 %v1794
    %2213 = vmatprep.subr.bf16.mxu0 %v1799
    %2214 = vmatpush1.bf16.msra.mxu0 %v1798
    %2215 = vmatprep.subr.bf16.mxu0 %v1803
    %2216 = vmatpush1.bf16.msra.mxu0 %v1802
    %2217 = vmatprep.mubr.bf16.mxu0 %v525
    %2218 = vmatmul.mubr.bf16.gmra.mrb[0].mxu0 %v524
    %v2219 = vpop.f32.mrb[0].mxu0
    %v2220 = vadd.f32 %v2179, %v2219
    %v2221 = vpop.f32.mrb[0].mxu0
    %v2222 = vadd.f32 %v2181, %v2221
    %v2223 = vpop.f32.mrb[0].mxu0
    %v2224 = vpop.f32.mrb[0].mxu0
    %2225 = vdwg.mxu0
    %2226 = vmatprep.subr.bf16.mxu0 %v1553
    %2227 = vmatpush1.bf16.msra.mxu0 %v1552
    %2228 = vmatprep.subr.bf16.mxu0 %v1557
    %2229 = vmatpush1.bf16.msra.mxu0 %v1556
    %2230 = vmatprep.subr.bf16.mxu0 %v1561
    %2231 = vmatpush1.bf16.msra.mxu0 %v1560
    %2232 = vmatprep.subr.bf16.mxu0 %v1565
    %2233 = vmatpush1.bf16.msra.mxu0 %v1564
    %2234 = vmatprep.subr.bf16.mxu0 %v1569
    %2235 = vmatpush1.bf16.msra.mxu0 %v1568
    %2236 = vmatprep.subr.bf16.mxu0 %v1573
    %2237 = vmatpush1.bf16.msra.mxu0 %v1572
    %2238 = vmatprep.subr.bf16.mxu0 %v1577
    %2239 = vmatpush1.bf16.msra.mxu0 %v1576
    %2240 = vmatprep.subr.bf16.mxu0 %v1581
    %2241 = vmatpush1.bf16.msra.mxu0 %v1580
    %2242 = vmatprep.subr.bf16.mxu0 %v1585
    %2243 = vmatpush1.bf16.msra.mxu0 %v1584
    %2244 = vmatprep.subr.bf16.mxu0 %v1589
    %2245 = vmatpush1.bf16.msra.mxu0 %v1588
    %2246 = vmatprep.subr.bf16.mxu0 %v1593
    %2247 = vmatpush1.bf16.msra.mxu0 %v1592
    %2248 = vmatprep.subr.bf16.mxu0 %v1597
    %2249 = vmatpush1.bf16.msra.mxu0 %v1596
    %2250 = vmatprep.subr.bf16.mxu0 %v1601
    %2251 = vmatpush1.bf16.msra.mxu0 %v1600
    %2252 = vmatprep.subr.bf16.mxu0 %v1605
    %2253 = vmatpush1.bf16.msra.mxu0 %v1604
    %2254 = vmatprep.subr.bf16.mxu0 %v1609
    %2255 = vmatpush1.bf16.msra.mxu0 %v1608
    %2256 = vmatprep.subr.bf16.mxu0 %v1613
    %2257 = vmatpush1.bf16.msra.mxu0 %v1612
    %2258 = vmatprep.mubr.bf16.mxu0 %v519
    %2259 = vmatmul.mubr.bf16.gmra.mrb[0].mxu0 %v518
    %v2260 = vpop.f32.mrb[0].mxu0
    %v2261 = vadd.f32 0.0, %v2260
    %v2262 = vpop.f32.mrb[0].mxu0
    %v2263 = vadd.f32 0.0, %v2262
    %v2264 = vpop.f32.mrb[0].mxu0
    %v2265 = vpop.f32.mrb[0].mxu0
    %2266 = vdwg.mxu0
    %2267 = vmatprep.subr.bf16.mxu0 %v1617
    %2268 = vmatpush1.bf16.msra.mxu0 %v1616
    %2269 = vmatprep.subr.bf16.mxu0 %v1621
    %2270 = vmatpush1.bf16.msra.mxu0 %v1620
    %2271 = vmatprep.subr.bf16.mxu0 %v1625
    %2272 = vmatpush1.bf16.msra.mxu0 %v1624
    %2273 = vmatprep.subr.bf16.mxu0 %v1629
    %2274 = vmatpush1.bf16.msra.mxu0 %v1628
    %2275 = vmatprep.subr.bf16.mxu0 %v1633
    %2276 = vmatpush1.bf16.msra.mxu0 %v1632
    %2277 = vmatprep.subr.bf16.mxu0 %v1637
    %2278 = vmatpush1.bf16.msra.mxu0 %v1636
    %2279 = vmatprep.subr.bf16.mxu0 %v1641
    %2280 = vmatpush1.bf16.msra.mxu0 %v1640
    %2281 = vmatprep.subr.bf16.mxu0 %v1645
    %2282 = vmatpush1.bf16.msra.mxu0 %v1644
    %2283 = vmatprep.subr.bf16.mxu0 %v1649
    %2284 = vmatpush1.bf16.msra.mxu0 %v1648
    %2285 = vmatprep.subr.bf16.mxu0 %v1653
    %2286 = vmatpush1.bf16.msra.mxu0 %v1652
    %2287 = vmatprep.subr.bf16.mxu0 %v1657
    %2288 = vmatpush1.bf16.msra.mxu0 %v1656
    %2289 = vmatprep.subr.bf16.mxu0 %v1661
    %2290 = vmatpush1.bf16.msra.mxu0 %v1660
    %2291 = vmatprep.subr.bf16.mxu0 %v1665
    %2292 = vmatpush1.bf16.msra.mxu0 %v1664
    %2293 = vmatprep.subr.bf16.mxu0 %v1669
    %2294 = vmatpush1.bf16.msra.mxu0 %v1668
    %2295 = vmatprep.subr.bf16.mxu0 %v1673
    %2296 = vmatpush1.bf16.msra.mxu0 %v1672
    %2297 = vmatprep.subr.bf16.mxu0 %v1677
    %2298 = vmatpush1.bf16.msra.mxu0 %v1676
    %2299 = vmatprep.mubr.bf16.mxu0 %v521
    %2300 = vmatmul.mubr.bf16.gmra.mrb[0].mxu0 %v520
    %v2301 = vpop.f32.mrb[0].mxu0
    %v2302 = vadd.f32 %v2261, %v2301
    %v2303 = vpop.f32.mrb[0].mxu0
    %v2304 = vadd.f32 %v2263, %v2303
    %v2305 = vpop.f32.mrb[0].mxu0
    %v2306 = vpop.f32.mrb[0].mxu0
    %2307 = vdwg.mxu0
    %2308 = vmatprep.subr.bf16.mxu0 %v1681
    %2309 = vmatpush1.bf16.msra.mxu0 %v1680
    %2310 = vmatprep.subr.bf16.mxu0 %v1685
    %2311 = vmatpush1.bf16.msra.mxu0 %v1684
    %2312 = vmatprep.subr.bf16.mxu0 %v1689
    %2313 = vmatpush1.bf16.msra.mxu0 %v1688
    %2314 = vmatprep.subr.bf16.mxu0 %v1693
    %2315 = vmatpush1.bf16.msra.mxu0 %v1692
    %2316 = vmatprep.subr.bf16.mxu0 %v1697
    %2317 = vmatpush1.bf16.msra.mxu0 %v1696
    %2318 = vmatprep.subr.bf16.mxu0 %v1701
    %2319 = vmatpush1.bf16.msra.mxu0 %v1700
    %2320 = vmatprep.subr.bf16.mxu0 %v1705
    %2321 = vmatpush1.bf16.msra.mxu0 %v1704
    %2322 = vmatprep.subr.bf16.mxu0 %v1709
    %2323 = vmatpush1.bf16.msra.mxu0 %v1708
    %2324 = vmatprep.subr.bf16.mxu0 %v1713
    %2325 = vmatpush1.bf16.msra.mxu0 %v1712
    %2326 = vmatprep.subr.bf16.mxu0 %v1717
    %2327 = vmatpush1.bf16.msra.mxu0 %v1716
    %2328 = vmatprep.subr.bf16.mxu0 %v1721
    %2329 = vmatpush1.bf16.msra.mxu0 %v1720
    %2330 = vmatprep.subr.bf16.mxu0 %v1725
    %2331 = vmatpush1.bf16.msra.mxu0 %v1724
    %2332 = vmatprep.subr.bf16.mxu0 %v1729
    %2333 = vmatpush1.bf16.msra.mxu0 %v1728
    %2334 = vmatprep.subr.bf16.mxu0 %v1733
    %2335 = vmatpush1.bf16.msra.mxu0 %v1732
    %2336 = vmatprep.subr.bf16.mxu0 %v1737
    %2337 = vmatpush1.bf16.msra.mxu0 %v1736
    %2338 = vmatprep.subr.bf16.mxu0 %v1741
    %2339 = vmatpush1.bf16.msra.mxu0 %v1740
    %2340 = vmatprep.mubr.bf16.mxu0 %v523
    %2341 = vmatmul.mubr.bf16.gmra.mrb[0].mxu0 %v522
    %v2342 = vpop.f32.mrb[0].mxu0
    %v2343 = vadd.f32 %v2302, %v2342
    %v2344 = vpop.f32.mrb[0].mxu0
    %v2345 = vadd.f32 %v2304, %v2344
    %v2346 = vpop.f32.mrb[0].mxu0
    %v2347 = vpop.f32.mrb[0].mxu0
    %2348 = vdwg.mxu0
    %2349 = vmatprep.subr.bf16.mxu0 %v1745
    %2350 = vmatpush1.bf16.msra.mxu0 %v1744
    %2351 = vmatprep.subr.bf16.mxu0 %v1749
    %2352 = vmatpush1.bf16.msra.mxu0 %v1748
    %2353 = vmatprep.subr.bf16.mxu0 %v1753
    %2354 = vmatpush1.bf16.msra.mxu0 %v1752
    %2355 = vmatprep.subr.bf16.mxu0 %v1757
    %2356 = vmatpush1.bf16.msra.mxu0 %v1756
    %2357 = vmatprep.subr.bf16.mxu0 %v1761
    %2358 = vmatpush1.bf16.msra.mxu0 %v1760
    %2359 = vmatprep.subr.bf16.mxu0 %v1765
    %2360 = vmatpush1.bf16.msra.mxu0 %v1764
    %2361 = vmatprep.subr.bf16.mxu0 %v1769
    %2362 = vmatpush1.bf16.msra.mxu0 %v1768
    %2363 = vmatprep.subr.bf16.mxu0 %v1773
    %2364 = vmatpush1.bf16.msra.mxu0 %v1772
    %2365 = vmatprep.subr.bf16.mxu0 %v1777
    %2366 = vmatpush1.bf16.msra.mxu0 %v1776
    %2367 = vmatprep.subr.bf16.mxu0 %v1781
    %2368 = vmatpush1.bf16.msra.mxu0 %v1780
    %2369 = vmatprep.subr.bf16.mxu0 %v1785
    %2370 = vmatpush1.bf16.msra.mxu0 %v1784
    %2371 = vmatprep.subr.bf16.mxu0 %v1789
    %2372 = vmatpush1.bf16.msra.mxu0 %v1788
    %2373 = vmatprep.subr.bf16.mxu0 %v1793
    %2374 = vmatpush1.bf16.msra.mxu0 %v1792
    %2375 = vmatprep.subr.bf16.mxu0 %v1797
    %2376 = vmatpush1.bf16.msra.mxu0 %v1796
    %2377 = vmatprep.subr.bf16.mxu0 %v1801
    %2378 = vmatpush1.bf16.msra.mxu0 %v1800
    %2379 = vmatprep.subr.bf16.mxu0 %v1805
    %2380 = vmatpush1.bf16.msra.mxu0 %v1804
    %2381 = vmatprep.mubr.bf16.mxu0 %v525
    %2382 = vmatmul.mubr.bf16.gmra.mrb[0].mxu0 %v524
    %v2383 = vpop.f32.mrb[0].mxu0
    %v2384 = vadd.f32 %v2343, %v2383
    %v2385 = vpop.f32.mrb[0].mxu0
    %v2386 = vadd.f32 %v2345, %v2385
    %v2387 = vpop.f32.mrb[0].mxu0
    %v2388 = vpop.f32.mrb[0].mxu0
    %2389 = vdwg.mxu0
    %v2390 = vpack.c.bf16 %v2220, %v2220
    %v2391 = vpack.c.bf16 %v2222, %v2222
    %v2392 = vpack.c.bf16 %v2384, %v2384
    %v2393 = vpack.c.bf16 %v2386, %v2386
    %v2394 = vld [vmem:[%s4] sm:$0xf]
    %v2397 = vunpack.c.l.s4 1966171168
    %v2398 = vunpack.c.0.s8 %v2397
    %v2399 = vlaneseq
    %v2400 = vshrl.u32 %v2399, 7
    %v2401 = vsub.s32 %v2398, %v2400
    %v2402 = vrot.slane %v2394, %v2401
    %v2403 = vcombine.high %v2402, %v2402
    %v2405 = vunpack.c.l.s4 1966171168
    %v2406 = vunpack.c.0.s8 %v2405
    %v2407 = vlaneseq
    %v2408 = vshrl.u32 %v2407, 7
    %v2409 = vsub.s32 %v2406, %v2408
    %v2410 = vrot.slane %v2402, %v2409
    %v2412 = vunpack.c.l.s4 1966171168
    %v2413 = vunpack.c.0.s8 %v2412
    %v2414 = vlaneseq
    %v2415 = vshrl.u32 %v2414, 7
    %v2416 = vsub.s32 %v2413, %v2415
    %v2417 = vrot.slane %v2403, %v2416
    %v2418 = vcombine.high %v2410, %v2410
    %v2419 = vcombine.high %v2417, %v2417
    %v2421 = vpack.i.b16 %v2410, %v2410
    %v2423 = vlaneseq
    %v2424 = vshrl.u32 %v2423, 7
    %v2425 = vsub.s32 0, %v2424
    %v2426 = vrot.slane %v2421, %v2425
    %v2428 = vpack.i.b16 %v2417, %v2417
    %v2430 = vlaneseq
    %v2431 = vshrl.u32 %v2430, 7
    %v2432 = vsub.s32 0, %v2431
    %v2433 = vrot.slane %v2428, %v2432
    %v2435 = vpack.i.b16 %v2418, %v2418
    %v2437 = vlaneseq
    %v2438 = vshrl.u32 %v2437, 7
    %v2439 = vsub.s32 0, %v2438
    %v2440 = vrot.slane %v2435, %v2439
    %v2442 = vpack.i.b16 %v2419, %v2419
    %v2444 = vlaneseq
    %v2445 = vshrl.u32 %v2444, 7
    %v2446 = vsub.s32 0, %v2445
    %v2447 = vrot.slane %v2442, %v2446
    %v2448 = vadd.bf16 %v2390, %v2426
    %v2449 = vadd.bf16 %v2391, %v2433
    %v2450 = vadd.bf16 %v2392, %v2440
    %v2451 = vadd.bf16 %v2393, %v2447
    %v2452 = vmul.bf16 %v2448, 1009007652
    %v2453 = vmul.bf16 %v2449, 1009007652
    %v2454 = vmul.bf16 %v2450, 1009007652
    %v2455 = vmul.bf16 %v2451, 1009007652
    %v2456 = vmax.bf16 %v2448, %v2452
    %v2457 = vmax.bf16 %v2449, %v2453
    %v2458 = vmax.bf16 %v2450, %v2454
    %v2459 = vmax.bf16 %v2451, %v2455
    %v2460 = vld [vmem:[#allocation10] sm:$0xf]
    %v2461 = vld [vmem:[#allocation10 + $0x4] sm:$0xf]
    %v2462 = vld [vmem:[#allocation10 + $0x8] sm:$0xf]
    %v2463 = vld [vmem:[#allocation10 + $0xc] sm:$0xf]
    %v2464 = vld [vmem:[#allocation10 + $0x10] sm:$0xf]
    %v2465 = vld [vmem:[#allocation10 + $0x14] sm:$0xf]
    %v2466 = vld [vmem:[#allocation10 + $0x18] sm:$0xf]
    %v2467 = vld [vmem:[#allocation10 + $0x1c] sm:$0xf]
    %v2468 = vld [vmem:[#allocation10 + $0x20] sm:$0xf]
    %v2469 = vld [vmem:[#allocation10 + $0x24] sm:$0xf]
    %v2470 = vld [vmem:[#allocation10 + $0x28] sm:$0xf]
    %v2471 = vld [vmem:[#allocation10 + $0x2c] sm:$0xf]
    %v2472 = vld [vmem:[#allocation10 + $0x30] sm:$0xf]
    %v2473 = vld [vmem:[#allocation10 + $0x34] sm:$0xf]
    %v2474 = vld [vmem:[#allocation10 + $0x38] sm:$0xf]
    %v2475 = vld [vmem:[#allocation10 + $0x3c] sm:$0xf]
    %v2476 = vld [vmem:[#allocation10 + $0x40] sm:$0xf]
    %v2477 = vld [vmem:[#allocation10 + $0x44] sm:$0xf]
    %v2478 = vld [vmem:[#allocation10 + $0x48] sm:$0xf]
    %v2479 = vld [vmem:[#allocation10 + $0x4c] sm:$0xf]
    %v2480 = vld [vmem:[#allocation10 + $0x50] sm:$0xf]
    %v2481 = vld [vmem:[#allocation10 + $0x54] sm:$0xf]
    %v2482 = vld [vmem:[#allocation10 + $0x58] sm:$0xf]
    %v2483 = vld [vmem:[#allocation10 + $0x5c] sm:$0xf]
    %v2484 = vld [vmem:[#allocation10 + $0x60] sm:$0xf]
    %v2485 = vld [vmem:[#allocation10 + $0x64] sm:$0xf]
    %v2486 = vld [vmem:[#allocation10 + $0x68] sm:$0xf]
    %v2487 = vld [vmem:[#allocation10 + $0x6c] sm:$0xf]
    %v2488 = vld [vmem:[#allocation10 + $0x70] sm:$0xf]
    %v2489 = vld [vmem:[#allocation10 + $0x74] sm:$0xf]
    %v2490 = vld [vmem:[#allocation10 + $0x78] sm:$0xf]
    %v2491 = vld [vmem:[#allocation10 + $0x7c] sm:$0xf]
    %v2492 = vld [vmem:[#allocation10 + $0x80] sm:$0xf]
    %v2493 = vld [vmem:[#allocation10 + $0x84] sm:$0xf]
    %v2494 = vld [vmem:[#allocation10 + $0x88] sm:$0xf]
    %v2495 = vld [vmem:[#allocation10 + $0x8c] sm:$0xf]
    %v2496 = vld [vmem:[#allocation10 + $0x90] sm:$0xf]
    %v2497 = vld [vmem:[#allocation10 + $0x94] sm:$0xf]
    %v2498 = vld [vmem:[#allocation10 + $0x98] sm:$0xf]
    %v2499 = vld [vmem:[#allocation10 + $0x9c] sm:$0xf]
    %v2500 = vld [vmem:[#allocation10 + $0xa0] sm:$0xf]
    %v2501 = vld [vmem:[#allocation10 + $0xa4] sm:$0xf]
    %v2502 = vld [vmem:[#allocation10 + $0xa8] sm:$0xf]
    %v2503 = vld [vmem:[#allocation10 + $0xac] sm:$0xf]
    %v2504 = vld [vmem:[#allocation10 + $0xb0] sm:$0xf]
    %v2505 = vld [vmem:[#allocation10 + $0xb4] sm:$0xf]
    %v2506 = vld [vmem:[#allocation10 + $0xb8] sm:$0xf]
    %v2507 = vld [vmem:[#allocation10 + $0xbc] sm:$0xf]
    %v2508 = vld [vmem:[#allocation10 + $0xc0] sm:$0xf]
    %v2509 = vld [vmem:[#allocation10 + $0xc4] sm:$0xf]
    %v2510 = vld [vmem:[#allocation10 + $0xc8] sm:$0xf]
    %v2511 = vld [vmem:[#allocation10 + $0xcc] sm:$0xf]
    %v2512 = vld [vmem:[#allocation10 + $0xd0] sm:$0xf]
    %v2513 = vld [vmem:[#allocation10 + $0xd4] sm:$0xf]
    %v2514 = vld [vmem:[#allocation10 + $0xd8] sm:$0xf]
    %v2515 = vld [vmem:[#allocation10 + $0xdc] sm:$0xf]
    %v2516 = vld [vmem:[#allocation10 + $0xe0] sm:$0xf]
    %v2517 = vld [vmem:[#allocation10 + $0xe4] sm:$0xf]
    %v2518 = vld [vmem:[#allocation10 + $0xe8] sm:$0xf]
    %v2519 = vld [vmem:[#allocation10 + $0xec] sm:$0xf]
    %v2520 = vld [vmem:[#allocation10 + $0xf0] sm:$0xf]
    %v2521 = vld [vmem:[#allocation10 + $0xf4] sm:$0xf]
    %v2522 = vld [vmem:[#allocation10 + $0xf8] sm:$0xf]
    %v2523 = vld [vmem:[#allocation10 + $0xfc] sm:$0xf]
    %v2588 = vunpack.c.l.b16 %v2460
    %v2589 = vunpack.c.l.b16 %v2461
    %v2590 = vunpack.c.l.b16 %v2462
    %v2591 = vunpack.c.l.b16 %v2463
    %v2592 = vunpack.c.l.b16 %v2464
    %v2593 = vunpack.c.l.b16 %v2465
    %v2594 = vunpack.c.l.b16 %v2466
    %v2595 = vunpack.c.l.b16 %v2467
    %v2596 = vunpack.c.l.b16 %v2468
    %v2597 = vunpack.c.l.b16 %v2469
    %v2598 = vunpack.c.l.b16 %v2470
    %v2599 = vunpack.c.l.b16 %v2471
    %v2600 = vunpack.c.l.b16 %v2472
    %v2601 = vunpack.c.l.b16 %v2473
    %v2602 = vunpack.c.l.b16 %v2474
    %v2603 = vunpack.c.l.b16 %v2475
    %v2604 = vunpack.c.l.b16 %v2476
    %v2605 = vunpack.c.l.b16 %v2477
    %v2606 = vunpack.c.l.b16 %v2478
    %v2607 = vunpack.c.l.b16 %v2479
    %v2608 = vunpack.c.l.b16 %v2480
    %v2609 = vunpack.c.l.b16 %v2481
    %v2610 = vunpack.c.l.b16 %v2482
    %v2611 = vunpack.c.l.b16 %v2483
    %v2612 = vunpack.c.l.b16 %v2484
    %v2613 = vunpack.c.l.b16 %v2485
    %v2614 = vunpack.c.l.b16 %v2486
    %v2615 = vunpack.c.l.b16 %v2487
    %v2616 = vunpack.c.l.b16 %v2488
    %v2617 = vunpack.c.l.b16 %v2489
    %v2618 = vunpack.c.l.b16 %v2490
    %v2619 = vunpack.c.l.b16 %v2491
    %v2620 = vunpack.c.l.b16 %v2492
    %v2621 = vunpack.c.l.b16 %v2493
    %v2622 = vunpack.c.l.b16 %v2494
    %v2623 = vunpack.c.l.b16 %v2495
    %v2624 = vunpack.c.l.b16 %v2496
    %v2625 = vunpack.c.l.b16 %v2497
    %v2626 = vunpack.c.l.b16 %v2498
    %v2627 = vunpack.c.l.b16 %v2499
    %v2628 = vunpack.c.l.b16 %v2500
    %v2629 = vunpack.c.l.b16 %v2501
    %v2630 = vunpack.c.l.b16 %v2502
    %v2631 = vunpack.c.l.b16 %v2503
    %v2632 = vunpack.c.l.b16 %v2504
    %v2633 = vunpack.c.l.b16 %v2505
    %v2634 = vunpack.c.l.b16 %v2506
    %v2635 = vunpack.c.l.b16 %v2507
    %v2636 = vunpack.c.l.b16 %v2508
    %v2637 = vunpack.c.l.b16 %v2509
    %v2638 = vunpack.c.l.b16 %v2510
    %v2639 = vunpack.c.l.b16 %v2511
    %v2640 = vunpack.c.l.b16 %v2512
    %v2641 = vunpack.c.l.b16 %v2513
    %v2642 = vunpack.c.l.b16 %v2514
    %v2643 = vunpack.c.l.b16 %v2515
    %v2644 = vunpack.c.l.b16 %v2516
    %v2645 = vunpack.c.l.b16 %v2517
    %v2646 = vunpack.c.l.b16 %v2518
    %v2647 = vunpack.c.l.b16 %v2519
    %v2648 = vunpack.c.l.b16 %v2520
    %v2649 = vunpack.c.l.b16 %v2521
    %v2650 = vunpack.c.l.b16 %v2522
    %v2651 = vunpack.c.l.b16 %v2523
    %v2652 = vpack.c.b16 %v2589, %v2588
    %v2653 = vpack.c.b16 %v2591, %v2590
    %v2654 = vpack.c.b16 %v2593, %v2592
    %v2655 = vpack.c.b16 %v2595, %v2594
    %v2656 = vpack.c.b16 %v2597, %v2596
    %v2657 = vpack.c.b16 %v2599, %v2598
    %v2658 = vpack.c.b16 %v2601, %v2600
    %v2659 = vpack.c.b16 %v2603, %v2602
    %v2660 = vpack.c.b16 %v2605, %v2604
    %v2661 = vpack.c.b16 %v2607, %v2606
    %v2662 = vpack.c.b16 %v2609, %v2608
    %v2663 = vpack.c.b16 %v2611, %v2610
    %v2664 = vpack.c.b16 %v2613, %v2612
    %v2665 = vpack.c.b16 %v2615, %v2614
    %v2666 = vpack.c.b16 %v2617, %v2616
    %v2667 = vpack.c.b16 %v2619, %v2618
    %v2668 = vpack.c.b16 %v2621, %v2620
    %v2669 = vpack.c.b16 %v2623, %v2622
    %v2670 = vpack.c.b16 %v2625, %v2624
    %v2671 = vpack.c.b16 %v2627, %v2626
    %v2672 = vpack.c.b16 %v2629, %v2628
    %v2673 = vpack.c.b16 %v2631, %v2630
    %v2674 = vpack.c.b16 %v2633, %v2632
    %v2675 = vpack.c.b16 %v2635, %v2634
    %v2676 = vpack.c.b16 %v2637, %v2636
    %v2677 = vpack.c.b16 %v2639, %v2638
    %v2678 = vpack.c.b16 %v2641, %v2640
    %v2679 = vpack.c.b16 %v2643, %v2642
    %v2680 = vpack.c.b16 %v2645, %v2644
    %v2681 = vpack.c.b16 %v2647, %v2646
    %v2682 = vpack.c.b16 %v2649, %v2648
    %v2683 = vpack.c.b16 %v2651, %v2650
    %2716 = vmatprep.subr.bf16.mxu0 0
    %2717 = vmatpush1.bf16.msra.mxu0 %v2652
    %2718 = vmatprep.subr.bf16.mxu0 0
    %2719 = vmatpush1.bf16.msra.mxu0 %v2653
    %2720 = vmatprep.subr.bf16.mxu0 0
    %2721 = vmatpush1.bf16.msra.mxu0 %v2654
    %2722 = vmatprep.subr.bf16.mxu0 0
    %2723 = vmatpush1.bf16.msra.mxu0 %v2655
    %2724 = vmatprep.subr.bf16.mxu0 0
    %2725 = vmatpush1.bf16.msra.mxu0 %v2656
    %2726 = vmatprep.subr.bf16.mxu0 0
    %2727 = vmatpush1.bf16.msra.mxu0 %v2657
    %2728 = vmatprep.subr.bf16.mxu0 0
    %2729 = vmatpush1.bf16.msra.mxu0 %v2658
    %2730 = vmatprep.subr.bf16.mxu0 0
    %2731 = vmatpush1.bf16.msra.mxu0 %v2659
    %2732 = vmatprep.subr.bf16.mxu0 0
    %2733 = vmatpush1.bf16.msra.mxu0 %v2660
    %2734 = vmatprep.subr.bf16.mxu0 0
    %2735 = vmatpush1.bf16.msra.mxu0 %v2661
    %2736 = vmatprep.subr.bf16.mxu0 0
    %2737 = vmatpush1.bf16.msra.mxu0 %v2662
    %2738 = vmatprep.subr.bf16.mxu0 0
    %2739 = vmatpush1.bf16.msra.mxu0 %v2663
    %2740 = vmatprep.subr.bf16.mxu0 0
    %2741 = vmatpush1.bf16.msra.mxu0 %v2664
    %2742 = vmatprep.subr.bf16.mxu0 0
    %2743 = vmatpush1.bf16.msra.mxu0 %v2665
    %2744 = vmatprep.subr.bf16.mxu0 0
    %2745 = vmatpush1.bf16.msra.mxu0 %v2666
    %2746 = vmatprep.subr.bf16.mxu0 0
    %2747 = vmatpush1.bf16.msra.mxu0 %v2667
    %2748 = vmatprep.mubr.bf16.mxu0 %v2457
    %2749 = vmatmul.mubr.bf16.gmra.mrb[0].mxu0 %v2456
    %v2750 = vpop.f32.mrb[0].mxu0
    %v2751 = vadd.f32 0.0, %v2750
    %v2752 = vpop.f32.mrb[0].mxu0
    %v2753 = vpop.f32.mrb[0].mxu0
    %v2754 = vpop.f32.mrb[0].mxu0
    %2755 = vdwg.mxu0
    %2756 = vmatprep.subr.bf16.mxu0 0
    %2757 = vmatpush1.bf16.msra.mxu0 %v2668
    %2758 = vmatprep.subr.bf16.mxu0 0
    %2759 = vmatpush1.bf16.msra.mxu0 %v2669
    %2760 = vmatprep.subr.bf16.mxu0 0
    %2761 = vmatpush1.bf16.msra.mxu0 %v2670
    %2762 = vmatprep.subr.bf16.mxu0 0
    %2763 = vmatpush1.bf16.msra.mxu0 %v2671
    %2764 = vmatprep.subr.bf16.mxu0 0
    %2765 = vmatpush1.bf16.msra.mxu0 %v2672
    %2766 = vmatprep.subr.bf16.mxu0 0
    %2767 = vmatpush1.bf16.msra.mxu0 %v2673
    %2768 = vmatprep.subr.bf16.mxu0 0
    %2769 = vmatpush1.bf16.msra.mxu0 %v2674
    %2770 = vmatprep.subr.bf16.mxu0 0
    %2771 = vmatpush1.bf16.msra.mxu0 %v2675
    %2772 = vmatprep.subr.bf16.mxu0 0
    %2773 = vmatpush1.bf16.msra.mxu0 %v2676
    %2774 = vmatprep.subr.bf16.mxu0 0
    %2775 = vmatpush1.bf16.msra.mxu0 %v2677
    %2776 = vmatprep.subr.bf16.mxu0 0
    %2777 = vmatpush1.bf16.msra.mxu0 %v2678
    %2778 = vmatprep.subr.bf16.mxu0 0
    %2779 = vmatpush1.bf16.msra.mxu0 %v2679
    %2780 = vmatprep.subr.bf16.mxu0 0
    %2781 = vmatpush1.bf16.msra.mxu0 %v2680
    %2782 = vmatprep.subr.bf16.mxu0 0
    %2783 = vmatpush1.bf16.msra.mxu0 %v2681
    %2784 = vmatprep.subr.bf16.mxu0 0
    %2785 = vmatpush1.bf16.msra.mxu0 %v2682
    %2786 = vmatprep.subr.bf16.mxu0 0
    %2787 = vmatpush1.bf16.msra.mxu0 %v2683
    %2788 = vmatprep.mubr.bf16.mxu0 %v2459
    %2789 = vmatmul.mubr.bf16.gmra.mrb[0].mxu0 %v2458
    %v2790 = vpop.f32.mrb[0].mxu0
    %v2791 = vadd.f32 %v2751, %v2790
    %v2792 = vpop.f32.mrb[0].mxu0
    %v2793 = vpop.f32.mrb[0].mxu0
    %v2794 = vpop.f32.mrb[0].mxu0
    %2795 = vdwg.mxu0
    %v2796 = vpack.c.bf16 %v2791, %v2791
    %v2797 = vld [vmem:[%s6] sm:$0x1]
    %v2799 = vpack.i.b16 %v2797, %v2797
    %v2801 = vlaneseq
    %v2802 = vshrl.u32 %v2801, 7
    %v2803 = vsub.s32 0, %v2802
    %v2804 = vrot.slane %v2799, %v2803
    %v2805 = vadd.bf16 %v2796, %v2804
    %v2806 = vmul.bf16 %v2805, 1009007652
    %v2807 = vmax.bf16 %v2805, %v2806
    %v2808 = vld [vmem:[#allocation11] sm:$0xf]
    %v2809 = vld [vmem:[#allocation11 + $0x4] sm:$0xf]
    %v2810 = vld [vmem:[#allocation11 + $0x8] sm:$0xf]
    %v2811 = vld [vmem:[#allocation11 + $0xc] sm:$0xf]
    %v2812 = vld [vmem:[#allocation11 + $0x10] sm:$0xf]
    %v2813 = vld [vmem:[#allocation11 + $0x14] sm:$0xf]
    %v2814 = vld [vmem:[#allocation11 + $0x18] sm:$0xf]
    %v2815 = vld [vmem:[#allocation11 + $0x1c] sm:$0xf]
    %v2816 = vld [vmem:[#allocation11 + $0x20] sm:$0xf]
    %v2817 = vld [vmem:[#allocation11 + $0x24] sm:$0xf]
    %v2818 = vld [vmem:[#allocation11 + $0x28] sm:$0xf]
    %v2819 = vld [vmem:[#allocation11 + $0x2c] sm:$0xf]
    %v2820 = vld [vmem:[#allocation11 + $0x30] sm:$0xf]
    %v2821 = vld [vmem:[#allocation11 + $0x34] sm:$0xf]
    %v2822 = vld [vmem:[#allocation11 + $0x38] sm:$0xf]
    %v2823 = vld [vmem:[#allocation11 + $0x3c] sm:$0xf]
    %v2840 = vunpack.c.l.b16 %v2808
    %v2841 = vunpack.c.l.b16 %v2809
    %v2842 = vunpack.c.l.b16 %v2810
    %v2843 = vunpack.c.l.b16 %v2811
    %v2844 = vunpack.c.l.b16 %v2812
    %v2845 = vunpack.c.l.b16 %v2813
    %v2846 = vunpack.c.l.b16 %v2814
    %v2847 = vunpack.c.l.b16 %v2815
    %v2848 = vunpack.c.l.b16 %v2816
    %v2849 = vunpack.c.l.b16 %v2817
    %v2850 = vunpack.c.l.b16 %v2818
    %v2851 = vunpack.c.l.b16 %v2819
    %v2852 = vunpack.c.l.b16 %v2820
    %v2853 = vunpack.c.l.b16 %v2821
    %v2854 = vunpack.c.l.b16 %v2822
    %v2855 = vunpack.c.l.b16 %v2823
    %v2856 = vpack.c.b16 %v2841, %v2840
    %v2857 = vpack.c.b16 %v2843, %v2842
    %v2858 = vpack.c.b16 %v2845, %v2844
    %v2859 = vpack.c.b16 %v2847, %v2846
    %v2860 = vpack.c.b16 %v2849, %v2848
    %v2861 = vpack.c.b16 %v2851, %v2850
    %v2862 = vpack.c.b16 %v2853, %v2852
    %v2863 = vpack.c.b16 %v2855, %v2854
    %2872 = vmatprep.subr.bf16.mxu0 0
    %2873 = vmatpush1.bf16.msra.mxu0 %v2856
    %2874 = vmatprep.subr.bf16.mxu0 0
    %2875 = vmatpush1.bf16.msra.mxu0 %v2857
    %2876 = vmatprep.subr.bf16.mxu0 0
    %2877 = vmatpush1.bf16.msra.mxu0 %v2858
    %2878 = vmatprep.subr.bf16.mxu0 0
    %2879 = vmatpush1.bf16.msra.mxu0 %v2859
    %2880 = vmatprep.subr.bf16.mxu0 0
    %2881 = vmatpush1.bf16.msra.mxu0 %v2860
    %2882 = vmatprep.subr.bf16.mxu0 0
    %2883 = vmatpush1.bf16.msra.mxu0 %v2861
    %2884 = vmatprep.subr.bf16.mxu0 0
    %2885 = vmatpush1.bf16.msra.mxu0 %v2862
    %2886 = vmatprep.subr.bf16.mxu0 0
    %2887 = vmatpush1.bf16.msra.mxu0 %v2863
    %2888 = vmatprep.subr.bf16.mxu0 0
    %2889 = vmatpush1.bf16.msra.mxu0 0
    %2890 = vmatprep.subr.bf16.mxu0 0
    %2891 = vmatpush1.bf16.msra.mxu0 0
    %2892 = vmatprep.subr.bf16.mxu0 0
    %2893 = vmatpush1.bf16.msra.mxu0 0
    %2894 = vmatprep.subr.bf16.mxu0 0
    %2895 = vmatpush1.bf16.msra.mxu0 0
    %2896 = vmatprep.subr.bf16.mxu0 0
    %2897 = vmatpush1.bf16.msra.mxu0 0
    %2898 = vmatprep.subr.bf16.mxu0 0
    %2899 = vmatpush1.bf16.msra.mxu0 0
    %2900 = vmatprep.subr.bf16.mxu0 0
    %2901 = vmatpush1.bf16.msra.mxu0 0
    %2902 = vmatprep.subr.bf16.mxu0 0
    %2903 = vmatpush1.bf16.msra.mxu0 0
    %2904 = vmatprep.mubr.bf16.mxu0 0
    %2905 = vmatmul.mubr.bf16.gmra.mrb[0].mxu0 %v2807
    %v2906 = vpop.f32.mrb[0].mxu0
    %v2907 = vadd.f32 0.0, %v2906
    %v2908 = vpop.f32.mrb[0].mxu0
    %v2909 = vpop.f32.mrb[0].mxu0
    %v2910 = vpop.f32.mrb[0].mxu0
    %2911 = vdwg.mxu0
    %v2912 = vpack.c.bf16 %v2907, %v2907
    %v2913 = vld [vmem:[%s8] sm:$0x1]
    %v2915 = vpack.i.b16 %v2913, %v2913
    %v2917 = vlaneseq
    %v2918 = vshrl.u32 %v2917, 7
    %v2919 = vsub.s32 0, %v2918
    %v2920 = vrot.slane %v2915, %v2919
    %v2921 = vadd.bf16 %v2912, %v2920
    %v2922 = vmul.bf16 %v2921, 1009007652
    %v2923 = vmax.bf16 %v2921, %v2922
    %v2924 = vld [vmem:[#allocation13] sm:$0xf]
    %v2925 = vld [vmem:[#allocation13 + $0x4] sm:$0xf]
    %v2926 = vld [vmem:[#allocation13 + $0x8] sm:$0xf]
    %v2927 = vld [vmem:[#allocation13 + $0xc] sm:$0xf]
    %v2928 = vld [vmem:[#allocation13 + $0x10] sm:$0xf]
    %v2929 = vld [vmem:[#allocation13 + $0x14] sm:$0xf]
    %v2930 = vld [vmem:[#allocation13 + $0x18] sm:$0xf]
    %v2931 = vld [vmem:[#allocation13 + $0x1c] sm:$0xf]
    %v2932 = vld [vmem:[#allocation13 + $0x20] sm:$0xf]
    %v2933 = vld [vmem:[#allocation13 + $0x24] sm:$0xf]
    %v2934 = vld [vmem:[#allocation13 + $0x28] sm:$0xf]
    %v2935 = vld [vmem:[#allocation13 + $0x2c] sm:$0xf]
    %v2936 = vld [vmem:[#allocation13 + $0x30] sm:$0xf]
    %v2937 = vld [vmem:[#allocation13 + $0x34] sm:$0xf]
    %v2938 = vld [vmem:[#allocation13 + $0x38] sm:$0xf]
    %v2939 = vld [vmem:[#allocation13 + $0x3c] sm:$0xf]
    %v2956 = vunpack.c.l.b16 %v2924
    %v2957 = vunpack.c.l.b16 %v2925
    %v2958 = vunpack.c.l.b16 %v2926
    %v2959 = vunpack.c.l.b16 %v2927
    %v2960 = vunpack.c.l.b16 %v2928
    %v2961 = vunpack.c.l.b16 %v2929
    %v2962 = vunpack.c.l.b16 %v2930
    %v2963 = vunpack.c.l.b16 %v2931
    %v2964 = vunpack.c.l.b16 %v2932
    %v2965 = vunpack.c.l.b16 %v2933
    %v2966 = vunpack.c.l.b16 %v2934
    %v2967 = vunpack.c.l.b16 %v2935
    %v2968 = vunpack.c.l.b16 %v2936
    %v2969 = vunpack.c.l.b16 %v2937
    %v2970 = vunpack.c.l.b16 %v2938
    %v2971 = vunpack.c.l.b16 %v2939
    %v2972 = vpack.c.b16 %v2957, %v2956
    %v2973 = vpack.c.b16 %v2959, %v2958
    %v2974 = vpack.c.b16 %v2961, %v2960
    %v2975 = vpack.c.b16 %v2963, %v2962
    %v2976 = vpack.c.b16 %v2965, %v2964
    %v2977 = vpack.c.b16 %v2967, %v2966
    %v2978 = vpack.c.b16 %v2969, %v2968
    %v2979 = vpack.c.b16 %v2971, %v2970
    %2988 = vmatprep.subr.bf16.mxu0 0
    %2989 = vmatpush1.bf16.msra.mxu0 %v2972
    %2990 = vmatprep.subr.bf16.mxu0 0
    %2991 = vmatpush1.bf16.msra.mxu0 %v2973
    %2992 = vmatprep.subr.bf16.mxu0 0
    %2993 = vmatpush1.bf16.msra.mxu0 %v2974
    %2994 = vmatprep.subr.bf16.mxu0 0
    %2995 = vmatpush1.bf16.msra.mxu0 %v2975
    %2996 = vmatprep.subr.bf16.mxu0 0
    %2997 = vmatpush1.bf16.msra.mxu0 %v2976
    %2998 = vmatprep.subr.bf16.mxu0 0
    %2999 = vmatpush1.bf16.msra.mxu0 %v2977
    %3000 = vmatprep.subr.bf16.mxu0 0
    %3001 = vmatpush1.bf16.msra.mxu0 %v2978
    %3002 = vmatprep.subr.bf16.mxu0 0
    %3003 = vmatpush1.bf16.msra.mxu0 %v2979
    %3004 = vmatprep.subr.bf16.mxu0 0
    %3005 = vmatpush1.bf16.msra.mxu0 0
    %3006 = vmatprep.subr.bf16.mxu0 0
    %3007 = vmatpush1.bf16.msra.mxu0 0
    %3008 = vmatprep.subr.bf16.mxu0 0
    %3009 = vmatpush1.bf16.msra.mxu0 0
    %3010 = vmatprep.subr.bf16.mxu0 0
    %3011 = vmatpush1.bf16.msra.mxu0 0
    %3012 = vmatprep.subr.bf16.mxu0 0
    %3013 = vmatpush1.bf16.msra.mxu0 0
    %3014 = vmatprep.subr.bf16.mxu0 0
    %3015 = vmatpush1.bf16.msra.mxu0 0
    %3016 = vmatprep.subr.bf16.mxu0 0
    %3017 = vmatpush1.bf16.msra.mxu0 0
    %3018 = vmatprep.subr.bf16.mxu0 0
    %3019 = vmatpush1.bf16.msra.mxu0 0
    %3020 = vmatprep.mubr.bf16.mxu0 0
    %3021 = vmatmul.mubr.bf16.gmra.mrb[0].mxu0 %v2923
    %v3022 = vpop.f32.mrb[0].mxu0
    %v3023 = vadd.f32 0.0, %v3022
    %v3024 = vpop.f32.mrb[0].mxu0
    %v3025 = vpop.f32.mrb[0].mxu0
    %v3026 = vpop.f32.mrb[0].mxu0
    %3027 = vdwg.mxu0
    %v3028 = vpack.c.bf16 %v3023, %v3023
    %v3029 = vld [vmem:[%s10] sm:$0x1]
    %v3031 = vpack.i.b16 %v3029, %v3029
    %v3033 = vlaneseq
    %v3034 = vshrl.u32 %v3033, 7
    %v3035 = vsub.s32 0, %v3034
    %v3036 = vrot.slane %v3031, %v3035
    %v3037 = vadd.bf16 %v3028, %v3036
    %v3038 = vmul.bf16 %v3037, 1009007652
    %v3039 = vmax.bf16 %v3037, %v3038
    %v3040 = vld [vmem:[#allocation14] sm:$0xf]
    %v3041 = vld [vmem:[#allocation14 + $0x4] sm:$0xf]
    %v3042 = vld [vmem:[#allocation14 + $0x8] sm:$0xf]
    %v3043 = vld [vmem:[#allocation14 + $0xc] sm:$0xf]
    %v3044 = vld [vmem:[#allocation14 + $0x10] sm:$0xf]
    %v3045 = vld [vmem:[#allocation14 + $0x14] sm:$0xf]
    %v3046 = vld [vmem:[#allocation14 + $0x18] sm:$0xf]
    %v3047 = vld [vmem:[#allocation14 + $0x1c] sm:$0xf]
    %v3048 = vld [vmem:[#allocation14 + $0x20] sm:$0xf]
    %v3049 = vld [vmem:[#allocation14 + $0x24] sm:$0xf]
    %v3050 = vld [vmem:[#allocation14 + $0x28] sm:$0xf]
    %v3051 = vld [vmem:[#allocation14 + $0x2c] sm:$0xf]
    %v3052 = vld [vmem:[#allocation14 + $0x30] sm:$0xf]
    %v3053 = vld [vmem:[#allocation14 + $0x34] sm:$0xf]
    %v3054 = vld [vmem:[#allocation14 + $0x38] sm:$0xf]
    %v3055 = vld [vmem:[#allocation14 + $0x3c] sm:$0xf]
    %v3056 = vld [vmem:[%s12] sm:$0x1]
    %v3058 = vlaneseq
    %v3059 = vshrl.u32 %v3058, 7
    %v3060 = vsub.s32 0, %v3059
    %v3061 = vrot.slane %v3056, %v3060
    %v3079 = vunpack.c.l.b16 %v3040
    %v3080 = vunpack.c.l.b16 %v3041
    %v3081 = vunpack.c.l.b16 %v3042
    %v3082 = vunpack.c.l.b16 %v3043
    %v3083 = vunpack.c.l.b16 %v3044
    %v3084 = vunpack.c.l.b16 %v3045
    %v3085 = vunpack.c.l.b16 %v3046
    %v3086 = vunpack.c.l.b16 %v3047
    %v3087 = vunpack.c.l.b16 %v3048
    %v3088 = vunpack.c.l.b16 %v3049
    %v3089 = vunpack.c.l.b16 %v3050
    %v3090 = vunpack.c.l.b16 %v3051
    %v3091 = vunpack.c.l.b16 %v3052
    %v3092 = vunpack.c.l.b16 %v3053
    %v3093 = vunpack.c.l.b16 %v3054
    %v3094 = vunpack.c.l.b16 %v3055
    %v3095 = vpack.c.b16 %v3080, %v3079
    %v3096 = vpack.c.b16 %v3082, %v3081
    %v3097 = vpack.c.b16 %v3084, %v3083
    %v3098 = vpack.c.b16 %v3086, %v3085
    %v3099 = vpack.c.b16 %v3088, %v3087
    %v3100 = vpack.c.b16 %v3090, %v3089
    %v3101 = vpack.c.b16 %v3092, %v3091
    %v3102 = vpack.c.b16 %v3094, %v3093
    %3111 = vmatprep.subr.bf16.mxu0 0
    %3112 = vmatpush1.bf16.msra.mxu0 %v3095
    %3113 = vmatprep.subr.bf16.mxu0 0
    %3114 = vmatpush1.bf16.msra.mxu0 %v3096
    %3115 = vmatprep.subr.bf16.mxu0 0
    %3116 = vmatpush1.bf16.msra.mxu0 %v3097
    %3117 = vmatprep.subr.bf16.mxu0 0
    %3118 = vmatpush1.bf16.msra.mxu0 %v3098
    %3119 = vmatprep.subr.bf16.mxu0 0
    %3120 = vmatpush1.bf16.msra.mxu0 %v3099
    %3121 = vmatprep.subr.bf16.mxu0 0
    %3122 = vmatpush1.bf16.msra.mxu0 %v3100
    %3123 = vmatprep.subr.bf16.mxu0 0
    %3124 = vmatpush1.bf16.msra.mxu0 %v3101
    %3125 = vmatprep.subr.bf16.mxu0 0
    %3126 = vmatpush1.bf16.msra.mxu0 %v3102
    %3127 = vmatprep.subr.bf16.mxu0 0
    %3128 = vmatpush1.bf16.msra.mxu0 0
    %3129 = vmatprep.subr.bf16.mxu0 0
    %3130 = vmatpush1.bf16.msra.mxu0 0
    %3131 = vmatprep.subr.bf16.mxu0 0
    %3132 = vmatpush1.bf16.msra.mxu0 0
    %3133 = vmatprep.subr.bf16.mxu0 0
    %3134 = vmatpush1.bf16.msra.mxu0 0
    %3135 = vmatprep.subr.bf16.mxu0 0
    %3136 = vmatpush1.bf16.msra.mxu0 0
    %3137 = vmatprep.subr.bf16.mxu0 0
    %3138 = vmatpush1.bf16.msra.mxu0 0
    %3139 = vmatprep.subr.bf16.mxu0 0
    %3140 = vmatpush1.bf16.msra.mxu0 0
    %3141 = vmatprep.subr.bf16.mxu0 0
    %3142 = vmatpush1.bf16.msra.mxu0 0
    %3143 = vmatprep.mubr.bf16.mxu0 0
    %3144 = vmatmul.mubr.bf16.gmra.mrb[0].mxu0 %v3039
    %v3145 = vpop.f32.mrb[0].mxu0
    %v3146 = vadd.f32 %v3061, %v3145
    %v3147 = vpop.f32.mrb[0].mxu0
    %v3148 = vpop.f32.mrb[0].mxu0
    %v3149 = vpop.f32.mrb[0].mxu0
    %3150 = vdwg.mxu0
    %3151 = vmax.xlane.f32.xlu0 %v3146
    %v3152 = vpop.xlane.xlu0 %3151
    %v3153 = vsub.f32 %v3146, %v3152
    %v3154 = vmul.f32 %v3153, 1.442695
    %v3155 = vpow.pop %v3154
    %3156 = vadd.xlane.f32.xlu0 %v3155
    %v3157 = vpop.xlane.xlu0 %3156
    %v3158 = vrcp.pop %v3157
    %v3159 = vmul.f32 %v3155, %v3158
    %v3160 = vpack.c.bf16 %v3159, %v3159
    %3161 = vst [vmem:[#allocation16] sm:$0xf] %v3160
    // Predicated region
    $region86: #{tpu_custom_call.1} parent=1 // pred_check
      _
    $region87: #{tpu_custom_call.1} parent=1 // pred_check_branch
      %3163 = sbr.rel (0) target = $region89
    $region88: #{tpu_custom_call.1} parent=1 // pred_region
      %s3165 = ssub.s32 64, 64
      %3166 = vsyncadd [#allocation4], %s3165
      %s3168 = sshll.u32 [#allocation16], 4
      %s3169 = int_to_ptr.vmem [resolvable:$true] %s3168
      %3171 = dma.vmem_to_hbm [thread:$0]  %s3169, 64, %s13, [#allocation4]
    $region89: #{tpu_custom_call.1} parent=1 // pred_fallthru
      _
    // Predicated region
    $region90: #{tpu_custom_call.1} parent=1 // pred_check
      _
    $region91: #{tpu_custom_call.1} parent=1 // pred_check_branch
      %3173 = sbr.rel (0) target = $region93
    $region92: #{tpu_custom_call.1} parent=1 // pred_region
      %3174 = dma.done [#allocation4], 64
    $region93: #{tpu_custom_call.1} parent=1 // pred_fallthru
      _
    %3175 = vsyncpa [#allocation3], 1
    %3176 = vsyncpa [#allocation6], 1
    %3177 = vsyncpa [#allocation9], 1
    %3178 = vsyncpa [#allocation12], 1
    %3179 = vsyncpa [#allocation15], 1
    %3180 = vsyncpa [#allocation4], 1

</llo_original>
